<compile_context>
chip_gen: v7x
topology: tpu7x:2x2x1
jax: 0.10.0
libtpu: 0.0.40
codegen_flags: <defaults>
</compile_context>

<pallas_src>
import math

import jax
import jax.numpy as jnp
from jax import lax
from jax.experimental import pallas as pl
from jax.experimental.pallas import tpu as pltpu

N_NODES = 64
NUM_FEATURES = 16
HIDDEN_DIM = 32
NUM_CLASSES = 8
N_COMPONENTS = 5
NUM_EDGES = 256

EPS = 1e-8
_LOG_2PI = math.log(2.0 * math.pi)
_INV_SQRT2 = 1.0 / math.sqrt(2.0)
_INV_SQRT_2PI = 1.0 / math.sqrt(2.0 * math.pi)


def _recip(x, approx):
    # In-kernel: approximate EUP reciprocal (own bundle slot, nearly free).
    # Reference: exact divide.
    if approx:
        return pl.reciprocal(x, approx=True)
    return 1.0 / x


def _erf(x, approx):
    # Abramowitz & Stegun 7.1.26 rational approximation (|err| <= 1.5e-7),
    # built only from ops with guaranteed Mosaic lowerings.
    a1, a2, a3, a4, a5 = 0.254829592, -0.284496736, 1.421413741, -1.453152027, 1.061405429
    p = 0.3275911
    sgn = jnp.where(x < 0.0, -1.0, 1.0)
    ax = jnp.abs(x)
    t = _recip(1.0 + p * ax, approx)
    poly = ((((a5 * t + a4) * t + a3) * t + a2) * t + a1) * t
    return sgn * (1.0 - poly * jnp.exp(-ax * ax))


def _normal_cdf(z, approx):
    return 0.5 * (1.0 + _erf(z * _INV_SQRT2, approx))


def _normal_pdf(z):
    return _INV_SQRT_2PI * jnp.exp(-0.5 * z * z)


def _gcnmf_math(adj, x, means_t, logvars_t, logp_row, w1, b1, w2, b2, *, approx):
    """Shared math for the kernel body and the pure-JAX reference.

    means_t / logvars_t: (F, K); logp_row: (1, K); b1: (1, H); b2: (1, C).
    """
    n = x.shape[0]
    n_feat, n_comp = means_t.shape
    hidden = w1.shape[1]
    kh = n_comp * hidden

    isnan = x != x                              # NaN detector (torch.isnan)
    obs = jnp.where(isnan, 0.0, 1.0)            # 1 where observed
    msk = 1.0 - obs                             # 1 where missing
    x_obs = jnp.where(isnan, 0.0, x)            # NaN -> 0

    inv_var_t = jnp.exp(-logvars_t)             # (F, K)  1/var without divide
    var_t = jnp.exp(logvars_t)                  # (F, K)
    w1_sq = w1 * w1

    # ---- layer-1 linear transforms, fused across the K components ----------
    # mean_mat_k = x_obs + msk * mean_k
    #   tx_k = mean_mat_k @ W1 + b1 = tx_base + msk @ (mean_k[:,None] * W1)
    # var_mat_k = msk * var_k
    #   tc_k = msk @ (var_k[:,None] * W1^2)
    tx_base = jnp.dot(x_obs, w1, preferred_element_type=jnp.float32) + b1     # (N, H)
    rhs_mean = jnp.concatenate(
        [means_t[:, k:k + 1] * w1 for k in range(n_comp)], axis=1)            # (F, K*H)
    rhs_var = jnp.concatenate(
        [var_t[:, k:k + 1] * w1_sq for k in range(n_comp)], axis=1)           # (F, K*H)
    rhs_msk = jnp.concatenate([rhs_mean, rhs_var], axis=1)                    # (F, 2*K*H)
    msk_mm = jnp.dot(msk, rhs_msk, preferred_element_type=jnp.float32)        # (N, 2*K*H)

    # ---- single adjacency product for everything (lane-dense, pad->mult 128)
    width = hidden + 2 * kh
    pad = (-width) % 128
    rhs_parts = [tx_base, msk_mm]
    if pad:
        rhs_parts.append(jnp.zeros((n, pad), jnp.float32))
    conv_rhs = jnp.concatenate(rhs_parts, axis=1)                             # (N, 384)
    conv = jnp.dot(adj, conv_rhs, preferred_element_type=jnp.float32)
    base_conv = conv[:, :hidden]                                              # adj @ tx_base
    cx_delta = conv[:, hidden:hidden + kh]                                    # (N, K*H)
    cc_all = conv[:, hidden + kh:hidden + 2 * kh]                             # (N, K*H)
    cx_all = jnp.concatenate([base_conv] * n_comp, axis=1) + cx_delta         # (N, K*H)

    # ---- E[ReLU(Z)], Z ~ N(cx, cc), on the whole (N, K*H) slab --------------
    inv_std = lax.rsqrt(cc_all + EPS)
    std = (cc_all + EPS) * inv_std
    z = cx_all * inv_std
    exp_relu = cx_all * _normal_cdf(z, approx) + std * _normal_pdf(z)         # (N, K*H)

    # ---- GMM responsibilities via one (N,3F)@(3F,K) matmul ------------------
    # quad[n,k] = sum_f obs * (x - mean_k)^2 / var_k
    #           = x_obs^2 @ iv_k - 2 x_obs @ (mean_k*iv_k) + obs @ (mean_k^2*iv_k)
    resp_lhs = jnp.concatenate([x_obs * x_obs, x_obs, obs], axis=1)           # (N, 3F)
    resp_rhs = jnp.concatenate(
        [inv_var_t, -2.0 * means_t * inv_var_t, means_t * means_t * inv_var_t],
        axis=0)                                                               # (3F, K)
    quad = jnp.dot(resp_lhs, resp_rhs, preferred_element_type=jnp.float32)    # (N, K)
    log_norm = -0.5 * (n_feat * _LOG_2PI
                       + jnp.sum(logvars_t, axis=0, keepdims=True))           # (1, K)
    log_prob = logp_row + log_norm - 0.5 * quad                               # (N, K)

    # softmax over components on the (N, K) slab
    m = jnp.max(log_prob, axis=1, keepdims=True)
    pexp = jnp.exp(log_prob - m)
    gamma = pexp * _recip(jnp.sum(pexp, axis=1, keepdims=True), approx)       # (N, K)

    # ---- mix components (streamed accumulation, one H-block live at a time) -
    h = gamma[:, 0:1] * exp_relu[:, :hidden]
    for k in range(1, n_comp):
        h = h + gamma[:, k:k + 1] * exp_relu[:, k * hidden:(k + 1) * hidden]  # (N, H)

    # ---- gc2 (plain GCN layer) + log_softmax over classes -------------------
    logits = jnp.dot(adj, jnp.dot(h, w2, preferred_element_type=jnp.float32),
                     preferred_element_type=jnp.float32) + b2                 # (N, C)
    mx = jnp.max(logits, axis=1, keepdims=True)
    shifted = logits - mx
    lse = jnp.log(jnp.sum(jnp.exp(shifted), axis=1, keepdims=True))
    return shifted - lse


def gcnmf_kernel(adj_ref, x_ref, means_t_ref, logvars_t_ref, logp_ref,
                 w1_ref, b1_ref, w2_ref, b2_ref, out_ref):
    out_ref[...] = _gcnmf_math(
        adj_ref[...], x_ref[...], means_t_ref[...], logvars_t_ref[...],
        logp_ref[...], w1_ref[...], b1_ref[...], w2_ref[...], b2_ref[...],
        approx=True)


def normalized_adjacency(edge_index, n):
    # Glue (plain JAX, run ONCE since edge_index is static): densify,
    # symmetrize, add self-loops, symmetric normalization D^-1/2 (A + I) D^-1/2.
    # TODO(synk): torch_geometric's gcn_norm is additive over duplicate edges;
    # maximum-based densification is used here (same as in-file reference).
    adj = jnp.zeros((n, n), jnp.float32)
    adj = adj.at[edge_index[0], edge_index[1]].set(1.0)
    adj = jnp.maximum(adj, adj.T)
    adj = jnp.maximum(adj, jnp.eye(n, dtype=jnp.float32))
    dinv = jax.lax.rsqrt(jnp.sum(adj, axis=1))
    return adj * dinv[:, None] * dinv[None, :]


def _pack_inputs(x, adj, params):
    # Only trivial param reshapes/transposes happen outside the kernel.
    return (adj, x,
            params["means"].T, params["logvars"].T,
            params["logp"].reshape(1, -1),
            params["w1"], params["b1"].reshape(1, -1),
            params["w2"], params["b2"].reshape(1, -1))


@jax.jit
def gcnmf_forward(x, adj, params):
    n = x.shape[0]
    n_classes = params["w2"].shape[1]
    inputs = _pack_inputs(x, adj, params)
    vmem = pltpu.MemorySpace.VMEM
    # Everything is tiny (N=64, footprint << 1 MiB), so the whole problem is a
    # single VMEM-resident block; one fused kernel does all matmuls/reductions.
    # TODO(synk): for batched graphs / larger N, add a leading grid axis with
    # dimension_semantics=("parallel",) to use both TensorCores on v7x.
    return pl.pallas_call(
        gcnmf_kernel,
        out_shape=jax.ShapeDtypeStruct((n, n_classes), jnp.float32),
        in_specs=[pl.BlockSpec(memory_space=vmem) for _ in inputs],
        out_specs=pl.BlockSpec(memory_space=vmem),
    )(*inputs)


@jax.jit
def gcnmf_reference(x, adj, params):
    inputs = _pack_inputs(x, adj, params)
    return _gcnmf_math(*inputs, approx=False)


def init_params(key):
    kw1, kw2, km, klv = jax.random.split(key, 4)
    # GCNmfConv / GCNConv reset_parameters: uniform(-1/sqrt(out), 1/sqrt(out)), zero bias
    stdv1 = 1.0 / math.sqrt(HIDDEN_DIM)
    w1 = jax.random.uniform(kw1, (NUM_FEATURES, HIDDEN_DIM), jnp.float32, -stdv1, stdv1)
    b1 = jnp.zeros((HIDDEN_DIM,), jnp.float32)
    stdv2 = 1.0 / math.sqrt(NUM_CLASSES)
    w2 = jax.random.uniform(kw2, (HIDDEN_DIM, NUM_CLASSES), jnp.float32, -stdv2, stdv2)
    b2 = jnp.zeros((NUM_CLASSES,), jnp.float32)
    # TODO(synk): reference fits a sklearn GaussianMixture via EM in __init__;
    # here the GMM params (logp / means / logvars) are deterministic synthetic.
    logp = jnp.log(jnp.full((N_COMPONENTS,), 1.0 / N_COMPONENTS, jnp.float32))
    means = 0.5 * jax.random.normal(km, (N_COMPONENTS, NUM_FEATURES), jnp.float32)
    logvars = 0.1 * jax.random.normal(klv, (N_COMPONENTS, NUM_FEATURES), jnp.float32)
    return dict(w1=w1, b1=b1, w2=w2, b2=b2, logp=logp, means=means, logvars=logvars)


if __name__ == "__main__":
    key = jax.random.PRNGKey(0)
    kx, ke, kmask, kp = jax.random.split(key, 4)

    x = jax.random.normal(kx, (N_NODES, NUM_FEATURES), jnp.float32)
    # ~30% of feature entries are missing (NaN) — this is what GCNmf handles.
    missing = jax.random.bernoulli(kmask, 0.3, (N_NODES, NUM_FEATURES))
    x = jnp.where(missing, jnp.float32(jnp.nan), x)
    edge_index = jax.random.randint(ke, (2, NUM_EDGES), 0, N_NODES, dtype=jnp.int32)

    params = init_params(kp)

    # A_hat depends only on the static graph: build it once, off the
    # per-forward critical path (cached across forward calls).
    adj = jax.block_until_ready(normalized_adjacency(edge_index, N_NODES))

    out = jax.block_until_ready(gcnmf_forward(x, adj, params))

    assert out.shape == (N_NODES, NUM_CLASSES)
    assert bool(jnp.all(jnp.isfinite(out)))
    ref = jax.block_until_ready(gcnmf_reference(x, adj, params))
    # Kernel uses EUP approximate reciprocal (pl.reciprocal approx=True);
    # reference uses exact divides, hence the slightly relaxed tolerance.
    assert bool(jnp.allclose(out, ref, rtol=2e-3, atol=1e-3))
    print("KERNEL_OK")
</pallas_src>

<mosaic_0001>
module attributes {stable_mosaic.version = 11 : i64} {
  func.func @gcnmf_kernel(%arg0: memref<64x64xf32, #tpu.memory_space<vmem>>, %arg1: memref<64x16xf32, #tpu.memory_space<vmem>>, %arg2: memref<16x5xf32, #tpu.memory_space<vmem>>, %arg3: memref<16x5xf32, #tpu.memory_space<vmem>>, %arg4: memref<1x5xf32, #tpu.memory_space<vmem>>, %arg5: memref<16x32xf32, #tpu.memory_space<vmem>>, %arg6: memref<1x32xf32, #tpu.memory_space<vmem>>, %arg7: memref<32x8xf32, #tpu.memory_space<vmem>>, %arg8: memref<1x8xf32, #tpu.memory_space<vmem>>, %arg9: memref<64x8xf32, #tpu.memory_space<vmem>>) attributes {dimension_semantics = [], scalar_prefetch = 0 : i64, scratch_operands = 0 : i64, tpu.core_type = #tpu.core_type<tc>} {
    %c0 = arith.constant 0 : index
    %c0_0 = arith.constant 0 : index
    %0 = vector.load %arg0[%c0, %c0_0] : memref<64x64xf32, #tpu.memory_space<vmem>>, vector<64x64xf32>
    %c0_1 = arith.constant 0 : index
    %c0_2 = arith.constant 0 : index
    %1 = vector.load %arg1[%c0_1, %c0_2] : memref<64x16xf32, #tpu.memory_space<vmem>>, vector<64x16xf32>
    %c0_3 = arith.constant 0 : index
    %c0_4 = arith.constant 0 : index
    %2 = vector.load %arg2[%c0_3, %c0_4] : memref<16x5xf32, #tpu.memory_space<vmem>>, vector<16x5xf32>
    %c0_5 = arith.constant 0 : index
    %c0_6 = arith.constant 0 : index
    %3 = vector.load %arg3[%c0_5, %c0_6] : memref<16x5xf32, #tpu.memory_space<vmem>>, vector<16x5xf32>
    %c0_7 = arith.constant 0 : index
    %c0_8 = arith.constant 0 : index
    %4 = vector.load %arg4[%c0_7, %c0_8] : memref<1x5xf32, #tpu.memory_space<vmem>>, vector<1x5xf32>
    %c0_9 = arith.constant 0 : index
    %c0_10 = arith.constant 0 : index
    %5 = vector.load %arg5[%c0_9, %c0_10] : memref<16x32xf32, #tpu.memory_space<vmem>>, vector<16x32xf32>
    %c0_11 = arith.constant 0 : index
    %c0_12 = arith.constant 0 : index
    %6 = vector.load %arg6[%c0_11, %c0_12] : memref<1x32xf32, #tpu.memory_space<vmem>>, vector<1x32xf32>
    %c0_13 = arith.constant 0 : index
    %c0_14 = arith.constant 0 : index
    %7 = vector.load %arg7[%c0_13, %c0_14] : memref<32x8xf32, #tpu.memory_space<vmem>>, vector<32x8xf32>
    %c0_15 = arith.constant 0 : index
    %c0_16 = arith.constant 0 : index
    %8 = vector.load %arg8[%c0_15, %c0_16] : memref<1x8xf32, #tpu.memory_space<vmem>>, vector<1x8xf32>
    %9 = arith.cmpf one, %1, %1 : vector<64x16xf32>
    %cst = arith.constant 0.000000e+00 : f32
    %cst_17 = arith.constant 1.000000e+00 : f32
    %10 = vector.broadcast %cst : f32 to vector<64x16xf32>
    %11 = vector.broadcast %cst_17 : f32 to vector<64x16xf32>
    %12 = arith.select %9, %10, %11 : vector<64x16xi1>, vector<64x16xf32>
    %cst_18 = arith.constant 1.000000e+00 : f32
    %13 = vector.broadcast %cst_18 : f32 to vector<64x16xf32>
    %14 = arith.subf %13, %12 : vector<64x16xf32>
    %cst_19 = arith.constant 0.000000e+00 : f32
    %15 = vector.broadcast %cst_19 : f32 to vector<64x16xf32>
    %16 = arith.select %9, %15, %1 : vector<64x16xi1>, vector<64x16xf32>
    %cst_20 = arith.constant 0.000000e+00 : f32
    %17 = vector.broadcast %cst_20 : f32 to vector<16x5xf32>
    %18 = arith.subf %17, %3 : vector<16x5xf32>
    %19 = math.exp %18 : vector<16x5xf32>
    %20 = math.exp %3 : vector<16x5xf32>
    %21 = arith.mulf %5, %5 : vector<16x32xf32>
    %cst_21 = arith.constant dense<0.000000e+00> : vector<64x32xf32>
    %22 = tpu.matmul %16, %5, %cst_21 {dimension_numbers = #tpu.dot_dimension_numbers<[1], [0], [0], [1], [0, 0, 1, 1], [], []>} : vector<64x16xf32>, vector<16x32xf32>, vector<64x32xf32> -> vector<64x32xf32>
    %23 = vector.broadcast %6 : vector<1x32xf32> to vector<64x32xf32>
    %24 = arith.addf %22, %23 : vector<64x32xf32>
    %25 = vector.extract_strided_slice %2 {offsets = [0, 0], sizes = [16, 1], strides = [1, 1]} : vector<16x5xf32> to vector<16x1xf32>
    %26 = vector.broadcast %25 : vector<16x1xf32> to vector<16x32xf32>
    %27 = arith.mulf %26, %5 : vector<16x32xf32>
    %28 = vector.extract_strided_slice %2 {offsets = [0, 1], sizes = [16, 1], strides = [1, 1]} : vector<16x5xf32> to vector<16x1xf32>
    %29 = vector.broadcast %28 : vector<16x1xf32> to vector<16x32xf32>
    %30 = arith.mulf %29, %5 : vector<16x32xf32>
    %31 = vector.extract_strided_slice %2 {offsets = [0, 2], sizes = [16, 1], strides = [1, 1]} : vector<16x5xf32> to vector<16x1xf32>
    %32 = vector.broadcast %31 : vector<16x1xf32> to vector<16x32xf32>
    %33 = arith.mulf %32, %5 : vector<16x32xf32>
    %34 = vector.extract_strided_slice %2 {offsets = [0, 3], sizes = [16, 1], strides = [1, 1]} : vector<16x5xf32> to vector<16x1xf32>
    %35 = vector.broadcast %34 : vector<16x1xf32> to vector<16x32xf32>
    %36 = arith.mulf %35, %5 : vector<16x32xf32>
    %37 = vector.extract_strided_slice %2 {offsets = [0, 4], sizes = [16, 1], strides = [1, 1]} : vector<16x5xf32> to vector<16x1xf32>
    %38 = vector.broadcast %37 : vector<16x1xf32> to vector<16x32xf32>
    %39 = arith.mulf %38, %5 : vector<16x32xf32>
    %40 = tpu.concatenate %27, %30, %33, %36, %39 in 1 : vector<16x32xf32>, vector<16x32xf32>, vector<16x32xf32>, vector<16x32xf32>, vector<16x32xf32> -> vector<16x160xf32>
    %41 = vector.extract_strided_slice %20 {offsets = [0, 0], sizes = [16, 1], strides = [1, 1]} : vector<16x5xf32> to vector<16x1xf32>
    %42 = vector.broadcast %41 : vector<16x1xf32> to vector<16x32xf32>
    %43 = arith.mulf %42, %21 : vector<16x32xf32>
    %44 = vector.extract_strided_slice %20 {offsets = [0, 1], sizes = [16, 1], strides = [1, 1]} : vector<16x5xf32> to vector<16x1xf32>
    %45 = vector.broadcast %44 : vector<16x1xf32> to vector<16x32xf32>
    %46 = arith.mulf %45, %21 : vector<16x32xf32>
    %47 = vector.extract_strided_slice %20 {offsets = [0, 2], sizes = [16, 1], strides = [1, 1]} : vector<16x5xf32> to vector<16x1xf32>
    %48 = vector.broadcast %47 : vector<16x1xf32> to vector<16x32xf32>
    %49 = arith.mulf %48, %21 : vector<16x32xf32>
    %50 = vector.extract_strided_slice %20 {offsets = [0, 3], sizes = [16, 1], strides = [1, 1]} : vector<16x5xf32> to vector<16x1xf32>
    %51 = vector.broadcast %50 : vector<16x1xf32> to vector<16x32xf32>
    %52 = arith.mulf %51, %21 : vector<16x32xf32>
    %53 = vector.extract_strided_slice %20 {offsets = [0, 4], sizes = [16, 1], strides = [1, 1]} : vector<16x5xf32> to vector<16x1xf32>
    %54 = vector.broadcast %53 : vector<16x1xf32> to vector<16x32xf32>
    %55 = arith.mulf %54, %21 : vector<16x32xf32>
    %56 = tpu.concatenate %43, %46, %49, %52, %55 in 1 : vector<16x32xf32>, vector<16x32xf32>, vector<16x32xf32>, vector<16x32xf32>, vector<16x32xf32> -> vector<16x160xf32>
    %57 = tpu.concatenate %40, %56 in 1 : vector<16x160xf32>, vector<16x160xf32> -> vector<16x320xf32>
    %cst_22 = arith.constant dense<0.000000e+00> : vector<64x320xf32>
    %58 = tpu.matmul %14, %57, %cst_22 {dimension_numbers = #tpu.dot_dimension_numbers<[1], [0], [0], [1], [0, 0, 1, 1], [], []>} : vector<64x16xf32>, vector<16x320xf32>, vector<64x320xf32> -> vector<64x320xf32>
    %cst_23 = arith.constant 0.000000e+00 : f32
    %59 = vector.broadcast %cst_23 : f32 to vector<64x32xf32>
    %60 = tpu.concatenate %24, %58, %59 in 1 : vector<64x32xf32>, vector<64x320xf32>, vector<64x32xf32> -> vector<64x384xf32>
    %cst_24 = arith.constant dense<0.000000e+00> : vector<64x384xf32>
    %61 = tpu.matmul %0, %60, %cst_24 {dimension_numbers = #tpu.dot_dimension_numbers<[1], [0], [0], [1], [0, 0, 1, 1], [], []>} : vector<64x64xf32>, vector<64x384xf32>, vector<64x384xf32> -> vector<64x384xf32>
    %62 = vector.extract_strided_slice %61 {offsets = [0, 0], sizes = [64, 32], strides = [1, 1]} : vector<64x384xf32> to vector<64x32xf32>
    %63 = vector.extract_strided_slice %61 {offsets = [0, 32], sizes = [64, 160], strides = [1, 1]} : vector<64x384xf32> to vector<64x160xf32>
    %64 = vector.extract_strided_slice %61 {offsets = [0, 192], sizes = [64, 160], strides = [1, 1]} : vector<64x384xf32> to vector<64x160xf32>
    %65 = tpu.concatenate %62, %62, %62, %62, %62 in 1 : vector<64x32xf32>, vector<64x32xf32>, vector<64x32xf32>, vector<64x32xf32>, vector<64x32xf32> -> vector<64x160xf32>
    %66 = arith.addf %65, %63 : vector<64x160xf32>
    %cst_25 = arith.constant 9.99999993E-9 : f32
    %67 = vector.broadcast %cst_25 : f32 to vector<64x160xf32>
    %68 = arith.addf %64, %67 : vector<64x160xf32>
    %69 = math.rsqrt %68 : vector<64x160xf32>
    %cst_26 = arith.constant 9.99999993E-9 : f32
    %70 = vector.broadcast %cst_26 : f32 to vector<64x160xf32>
    %71 = arith.addf %64, %70 : vector<64x160xf32>
    %72 = arith.mulf %71, %69 : vector<64x160xf32>
    %73 = arith.mulf %66, %69 : vector<64x160xf32>
    %cst_27 = arith.constant 0.707106769 : f32
    %74 = vector.broadcast %cst_27 : f32 to vector<64x160xf32>
    %75 = arith.mulf %73, %74 : vector<64x160xf32>
    %cst_28 = arith.constant 0.000000e+00 : f32
    %76 = vector.broadcast %cst_28 : f32 to vector<64x160xf32>
    %77 = arith.cmpf olt, %75, %76 : vector<64x160xf32>
    %cst_29 = arith.constant -1.000000e+00 : f32
    %cst_30 = arith.constant 1.000000e+00 : f32
    %78 = vector.broadcast %cst_29 : f32 to vector<64x160xf32>
    %79 = vector.broadcast %cst_30 : f32 to vector<64x160xf32>
    %80 = arith.select %77, %78, %79 : vector<64x160xi1>, vector<64x160xf32>
    %81 = math.absf %75 : vector<64x160xf32>
    %cst_31 = arith.constant 0.327591091 : f32
    %82 = vector.broadcast %cst_31 : f32 to vector<64x160xf32>
    %83 = arith.mulf %82, %81 : vector<64x160xf32>
    %cst_32 = arith.constant 1.000000e+00 : f32
    %84 = vector.broadcast %cst_32 : f32 to vector<64x160xf32>
    %85 = arith.addf %84, %83 : vector<64x160xf32>
    %86 = tpu.reciprocal %85 {approx = true} : vector<64x160xf32> -> vector<64x160xf32>
    %cst_33 = arith.constant 1.06140542 : f32
    %87 = vector.broadcast %cst_33 : f32 to vector<64x160xf32>
    %88 = arith.mulf %87, %86 : vector<64x160xf32>
    %cst_34 = arith.constant -1.45315206 : f32
    %89 = vector.broadcast %cst_34 : f32 to vector<64x160xf32>
    %90 = arith.addf %88, %89 : vector<64x160xf32>
    %91 = arith.mulf %90, %86 : vector<64x160xf32>
    %cst_35 = arith.constant 1.42141378 : f32
    %92 = vector.broadcast %cst_35 : f32 to vector<64x160xf32>
    %93 = arith.addf %91, %92 : vector<64x160xf32>
    %94 = arith.mulf %93, %86 : vector<64x160xf32>
    %cst_36 = arith.constant -0.284496725 : f32
    %95 = vector.broadcast %cst_36 : f32 to vector<64x160xf32>
    %96 = arith.addf %94, %95 : vector<64x160xf32>
    %97 = arith.mulf %96, %86 : vector<64x160xf32>
    %cst_37 = arith.constant 0.254829586 : f32
    %98 = vector.broadcast %cst_37 : f32 to vector<64x160xf32>
    %99 = arith.addf %97, %98 : vector<64x160xf32>
    %100 = arith.mulf %99, %86 : vector<64x160xf32>
    %cst_38 = arith.constant 0.000000e+00 : f32
    %101 = vector.broadcast %cst_38 : f32 to vector<64x160xf32>
    %102 = arith.subf %101, %81 : vector<64x160xf32>
    %103 = arith.mulf %102, %81 : vector<64x160xf32>
    %104 = math.exp %103 : vector<64x160xf32>
    %105 = arith.mulf %100, %104 : vector<64x160xf32>
    %cst_39 = arith.constant 1.000000e+00 : f32
    %106 = vector.broadcast %cst_39 : f32 to vector<64x160xf32>
    %107 = arith.subf %106, %105 : vector<64x160xf32>
    %108 = arith.mulf %80, %107 : vector<64x160xf32>
    %cst_40 = arith.constant 1.000000e+00 : f32
    %109 = vector.broadcast %cst_40 : f32 to vector<64x160xf32>
    %110 = arith.addf %109, %108 : vector<64x160xf32>
    %cst_41 = arith.constant 5.000000e-01 : f32
    %111 = vector.broadcast %cst_41 : f32 to vector<64x160xf32>
    %112 = arith.mulf %111, %110 : vector<64x160xf32>
    %113 = arith.mulf %66, %112 : vector<64x160xf32>
    %cst_42 = arith.constant -5.000000e-01 : f32
    %114 = vector.broadcast %cst_42 : f32 to vector<64x160xf32>
    %115 = arith.mulf %114, %73 : vector<64x160xf32>
    %116 = arith.mulf %115, %73 : vector<64x160xf32>
    %117 = math.exp %116 : vector<64x160xf32>
    %cst_43 = arith.constant 0.398942292 : f32
    %118 = vector.broadcast %cst_43 : f32 to vector<64x160xf32>
    %119 = arith.mulf %118, %117 : vector<64x160xf32>
    %120 = arith.mulf %72, %119 : vector<64x160xf32>
    %121 = arith.addf %113, %120 : vector<64x160xf32>
    %122 = arith.mulf %16, %16 : vector<64x16xf32>
    %123 = tpu.concatenate %122, %16, %12 in 1 : vector<64x16xf32>, vector<64x16xf32>, vector<64x16xf32> -> vector<64x48xf32>
    %cst_44 = arith.constant -2.000000e+00 : f32
    %124 = vector.broadcast %cst_44 : f32 to vector<16x5xf32>
    %125 = arith.mulf %124, %2 : vector<16x5xf32>
    %126 = arith.mulf %125, %19 : vector<16x5xf32>
    %127 = arith.mulf %2, %2 : vector<16x5xf32>
    %128 = arith.mulf %127, %19 : vector<16x5xf32>
    %129 = tpu.concatenate %19, %126, %128 in 0 : vector<16x5xf32>, vector<16x5xf32>, vector<16x5xf32> -> vector<48x5xf32>
    %cst_45 = arith.constant dense<0.000000e+00> : vector<64x5xf32>
    %130 = tpu.matmul %123, %129, %cst_45 {dimension_numbers = #tpu.dot_dimension_numbers<[1], [0], [0], [1], [0, 0, 1, 1], [], []>} : vector<64x48xf32>, vector<48x5xf32>, vector<64x5xf32> -> vector<64x5xf32>
    %cst_46 = arith.constant dense<0.000000e+00> : vector<5xf32>
    %131 = vector.multi_reduction <add>, %3, %cst_46 [0] : vector<16x5xf32> to vector<5xf32>
    %132 = vector.shape_cast %131 : vector<5xf32> to vector<1x5xf32>
    %cst_47 = arith.constant 29.4060326 : f32
    %133 = vector.broadcast %cst_47 : f32 to vector<1x5xf32>
    %134 = arith.addf %133, %132 : vector<1x5xf32>
    %cst_48 = arith.constant -5.000000e-01 : f32
    %135 = vector.broadcast %cst_48 : f32 to vector<1x5xf32>
    %136 = arith.mulf %135, %134 : vector<1x5xf32>
    %137 = arith.addf %4, %136 : vector<1x5xf32>
    %cst_49 = arith.constant 5.000000e-01 : f32
    %138 = vector.broadcast %cst_49 : f32 to vector<64x5xf32>
    %139 = arith.mulf %138, %130 : vector<64x5xf32>
    %140 = vector.broadcast %137 : vector<1x5xf32> to vector<64x5xf32>
    %141 = arith.subf %140, %139 : vector<64x5xf32>
    %cst_50 = arith.constant dense<0xFF800000> : vector<64xf32>
    %142 = vector.multi_reduction <maximumf>, %141, %cst_50 [1] : vector<64x5xf32> to vector<64xf32>
    %143 = vector.shape_cast %142 : vector<64xf32> to vector<64x1xf32>
    %144 = vector.broadcast %143 : vector<64x1xf32> to vector<64x5xf32>
    %145 = arith.subf %141, %144 : vector<64x5xf32>
    %146 = math.exp %145 : vector<64x5xf32>
    %cst_51 = arith.constant dense<0.000000e+00> : vector<64xf32>
    %147 = vector.multi_reduction <add>, %146, %cst_51 [1] : vector<64x5xf32> to vector<64xf32>
    %148 = vector.shape_cast %147 : vector<64xf32> to vector<64x1xf32>
    %149 = tpu.reciprocal %148 {approx = true} : vector<64x1xf32> -> vector<64x1xf32>
    %150 = vector.broadcast %149 : vector<64x1xf32> to vector<64x5xf32>
    %151 = arith.mulf %146, %150 : vector<64x5xf32>
    %152 = vector.extract_strided_slice %151 {offsets = [0, 0], sizes = [64, 1], strides = [1, 1]} : vector<64x5xf32> to vector<64x1xf32>
    %153 = vector.extract_strided_slice %121 {offsets = [0, 0], sizes = [64, 32], strides = [1, 1]} : vector<64x160xf32> to vector<64x32xf32>
    %154 = vector.broadcast %152 : vector<64x1xf32> to vector<64x32xf32>
    %155 = arith.mulf %154, %153 : vector<64x32xf32>
    %156 = vector.extract_strided_slice %151 {offsets = [0, 1], sizes = [64, 1], strides = [1, 1]} : vector<64x5xf32> to vector<64x1xf32>
    %157 = vector.extract_strided_slice %121 {offsets = [0, 32], sizes = [64, 32], strides = [1, 1]} : vector<64x160xf32> to vector<64x32xf32>
    %158 = vector.broadcast %156 : vector<64x1xf32> to vector<64x32xf32>
    %159 = arith.mulf %158, %157 : vector<64x32xf32>
    %160 = arith.addf %155, %159 : vector<64x32xf32>
    %161 = vector.extract_strided_slice %151 {offsets = [0, 2], sizes = [64, 1], strides = [1, 1]} : vector<64x5xf32> to vector<64x1xf32>
    %162 = vector.extract_strided_slice %121 {offsets = [0, 64], sizes = [64, 32], strides = [1, 1]} : vector<64x160xf32> to vector<64x32xf32>
    %163 = vector.broadcast %161 : vector<64x1xf32> to vector<64x32xf32>
    %164 = arith.mulf %163, %162 : vector<64x32xf32>
    %165 = arith.addf %160, %164 : vector<64x32xf32>
    %166 = vector.extract_strided_slice %151 {offsets = [0, 3], sizes = [64, 1], strides = [1, 1]} : vector<64x5xf32> to vector<64x1xf32>
    %167 = vector.extract_strided_slice %121 {offsets = [0, 96], sizes = [64, 32], strides = [1, 1]} : vector<64x160xf32> to vector<64x32xf32>
    %168 = vector.broadcast %166 : vector<64x1xf32> to vector<64x32xf32>
    %169 = arith.mulf %168, %167 : vector<64x32xf32>
    %170 = arith.addf %165, %169 : vector<64x32xf32>
    %171 = vector.extract_strided_slice %151 {offsets = [0, 4], sizes = [64, 1], strides = [1, 1]} : vector<64x5xf32> to vector<64x1xf32>
    %172 = vector.extract_strided_slice %121 {offsets = [0, 128], sizes = [64, 32], strides = [1, 1]} : vector<64x160xf32> to vector<64x32xf32>
    %173 = vector.broadcast %171 : vector<64x1xf32> to vector<64x32xf32>
    %174 = arith.mulf %173, %172 : vector<64x32xf32>
    %175 = arith.addf %170, %174 : vector<64x32xf32>
    %cst_52 = arith.constant dense<0.000000e+00> : vector<64x8xf32>
    %176 = tpu.matmul %175, %7, %cst_52 {dimension_numbers = #tpu.dot_dimension_numbers<[1], [0], [0], [1], [0, 0, 1, 1], [], []>} : vector<64x32xf32>, vector<32x8xf32>, vector<64x8xf32> -> vector<64x8xf32>
    %cst_53 = arith.constant dense<0.000000e+00> : vector<64x8xf32>
    %177 = tpu.matmul %0, %176, %cst_53 {dimension_numbers = #tpu.dot_dimension_numbers<[1], [0], [0], [1], [0, 0, 1, 1], [], []>} : vector<64x64xf32>, vector<64x8xf32>, vector<64x8xf32> -> vector<64x8xf32>
    %178 = vector.broadcast %8 : vector<1x8xf32> to vector<64x8xf32>
    %179 = arith.addf %177, %178 : vector<64x8xf32>
    %cst_54 = arith.constant dense<0xFF800000> : vector<64xf32>
    %180 = vector.multi_reduction <maximumf>, %179, %cst_54 [1] : vector<64x8xf32> to vector<64xf32>
    %181 = vector.shape_cast %180 : vector<64xf32> to vector<64x1xf32>
    %182 = vector.broadcast %181 : vector<64x1xf32> to vector<64x8xf32>
    %183 = arith.subf %179, %182 : vector<64x8xf32>
    %184 = math.exp %183 : vector<64x8xf32>
    %cst_55 = arith.constant dense<0.000000e+00> : vector<64xf32>
    %185 = vector.multi_reduction <add>, %184, %cst_55 [1] : vector<64x8xf32> to vector<64xf32>
    %186 = vector.shape_cast %185 : vector<64xf32> to vector<64x1xf32>
    %187 = math.log %186 : vector<64x1xf32>
    %188 = vector.broadcast %187 : vector<64x1xf32> to vector<64x8xf32>
    %189 = arith.subf %183, %188 : vector<64x8xf32>
    %c0_56 = arith.constant 0 : index
    %c0_57 = arith.constant 0 : index
    %190 = vector.load %arg9[%c0_56, %c0_57] : memref<64x8xf32, #tpu.memory_space<vmem>>, vector<64x8xf32>
    tpu.vector_store %arg9[%c0_56, %c0_57], %189 {strides = array<i32>} : memref<64x8xf32, #tpu.memory_space<vmem>>, vector<64x8xf32>,
    return
  }
}

</mosaic_0001>

<llo_original>
// kernel: gcnmf_forward.1
$region0: #{gcnmf_forward.1}
  #allocation0 [shape = 'u32[]', space=smem, size = 0x4, offset = 0x4, fixed_abs, tag = 'smem constant byte address 0x4 - core index']
  #allocation1 [shape = 'u32[144,128]{1,0:T(1,128)}', space=vmem, size = 0x12000, scoped, tag = 'internal scratch']
  %s0 = inlined_call_operand.vmem [shape: f32[64,64], index: 0, kind: input, shape index: {}]
  %s1 = inlined_call_operand.vmem [shape: f32[64,16], index: 1, kind: input, shape index: {}]
  %s2 = inlined_call_operand.vmem [shape: f32[16,5], index: 2, kind: input, shape index: {}]
  %s3 = inlined_call_operand.vmem [shape: f32[16,5], index: 3, kind: input, shape index: {}]
  %s4 = inlined_call_operand.vmem [shape: f32[1,5], index: 4, kind: input, shape index: {}]
  %s5 = inlined_call_operand.vmem [shape: f32[16,32], index: 5, kind: input, shape index: {}]
  %s6 = inlined_call_operand.vmem [shape: f32[1,32], index: 6, kind: input, shape index: {}]
  %s7 = inlined_call_operand.vmem [shape: f32[32,8], index: 7, kind: input, shape index: {}]
  %s8 = inlined_call_operand.vmem [shape: f32[1,8], index: 8, kind: input, shape index: {}]
  %s9 = inlined_call_operand.vmem [shape: f32[64,8], index: 9, kind: output, shape index: {}]
  %s10 = sld [smem:[#allocation0]]
  $region46: #{gcnmf_forward.1} parent=0
    _
  %s12 = ssub.s32 1, %s10
  %s13 = scalar_select 0, %s12, %s10
  // Predicated region
  $region2: #{gcnmf_forward.1} parent=0 // pred_check
    _
  $region3: #{gcnmf_forward.1} parent=0 // pred_check_branch
    %15 = sbr.rel (0) target = $region5
  $region4: #{gcnmf_forward.1} parent=0 // pred_region
    _
  $region5: #{gcnmf_forward.1} parent=0 // pred_fallthru
    _
  // Predicated region
  $region6: #{gcnmf_forward.1} parent=0 // pred_check
    _
  $region7: #{gcnmf_forward.1} parent=0 // pred_check_branch
    %17 = sbr.rel (0) target = $region9
  $region8: #{gcnmf_forward.1} parent=0 // pred_region
    _
  $region9: #{gcnmf_forward.1} parent=0 // pred_fallthru
    _
  // Predicated region
  $region10: #{gcnmf_forward.1} parent=0 // pred_check
    _
  $region11: #{gcnmf_forward.1} parent=0 // pred_check_branch
    %19 = sbr.rel (0) target = $region13
  $region12: #{gcnmf_forward.1} parent=0 // pred_region
    _
  $region13: #{gcnmf_forward.1} parent=0 // pred_fallthru
    _
  // Predicated region
  $region14: #{gcnmf_forward.1} parent=0 // pred_check
    _
  $region15: #{gcnmf_forward.1} parent=0 // pred_check_branch
    %21 = sbr.rel (0) target = $region17
  $region16: #{gcnmf_forward.1} parent=0 // pred_region
    _
  $region17: #{gcnmf_forward.1} parent=0 // pred_fallthru
    _
  // Predicated region
  $region18: #{gcnmf_forward.1} parent=0 // pred_check
    _
  $region19: #{gcnmf_forward.1} parent=0 // pred_check_branch
    %23 = sbr.rel (0) target = $region21
  $region20: #{gcnmf_forward.1} parent=0 // pred_region
    _
  $region21: #{gcnmf_forward.1} parent=0 // pred_fallthru
    _
  // Predicated region
  $region22: #{gcnmf_forward.1} parent=0 // pred_check
    _
  $region23: #{gcnmf_forward.1} parent=0 // pred_check_branch
    %25 = sbr.rel (0) target = $region25
  $region24: #{gcnmf_forward.1} parent=0 // pred_region
    _
  $region25: #{gcnmf_forward.1} parent=0 // pred_fallthru
    _
  // Predicated region
  $region26: #{gcnmf_forward.1} parent=0 // pred_check
    _
  $region27: #{gcnmf_forward.1} parent=0 // pred_check_branch
    %27 = sbr.rel (0) target = $region29
  $region28: #{gcnmf_forward.1} parent=0 // pred_region
    _
  $region29: #{gcnmf_forward.1} parent=0 // pred_fallthru
    _
  // Predicated region
  $region30: #{gcnmf_forward.1} parent=0 // pred_check
    _
  $region31: #{gcnmf_forward.1} parent=0 // pred_check_branch
    %29 = sbr.rel (0) target = $region33
  $region32: #{gcnmf_forward.1} parent=0 // pred_region
    _
  $region33: #{gcnmf_forward.1} parent=0 // pred_fallthru
    _
  // Predicated region
  $region34: #{gcnmf_forward.1} parent=0 // pred_check
    _
  $region35: #{gcnmf_forward.1} parent=0 // pred_check_branch
    %31 = sbr.rel (0) target = $region37
  $region36: #{gcnmf_forward.1} parent=0 // pred_region
    _
  $region37: #{gcnmf_forward.1} parent=0 // pred_fallthru
    _
  %v32 = vld [vmem:[%s0] sm:$0xff]
  %v33 = vld [vmem:[%s0 + $0x8] sm:$0xff]
  %v34 = vld [vmem:[%s0 + $0x10] sm:$0xff]
  %v35 = vld [vmem:[%s0 + $0x18] sm:$0xff]
  %v36 = vld [vmem:[%s0 + $0x20] sm:$0xff]
  %v37 = vld [vmem:[%s0 + $0x28] sm:$0xff]
  %v38 = vld [vmem:[%s0 + $0x30] sm:$0xff]
  %v39 = vld [vmem:[%s0 + $0x38] sm:$0xff]
  %v40 = vld [vmem:[%s1] sm:$0xff]
  %v41 = vld [vmem:[%s1 + $0x8] sm:$0xff]
  %v42 = vld [vmem:[%s1 + $0x10] sm:$0xff]
  %v43 = vld [vmem:[%s1 + $0x18] sm:$0xff]
  %v44 = vld [vmem:[%s1 + $0x20] sm:$0xff]
  %v45 = vld [vmem:[%s1 + $0x28] sm:$0xff]
  %v46 = vld [vmem:[%s1 + $0x30] sm:$0xff]
  %v47 = vld [vmem:[%s1 + $0x38] sm:$0xff]
  %v48 = vld [vmem:[%s2] sm:$0xff]
  %v49 = vld [vmem:[%s2 + $0x8] sm:$0xff]
  %v50 = vld [vmem:[%s3] sm:$0xff]
  %v51 = vld [vmem:[%s3 + $0x8] sm:$0xff]
  %v52 = vld [vmem:[%s4] sm:$0x1]
  %v53 = vld [vmem:[%s5] sm:$0xff]
  %v54 = vld [vmem:[%s5 + $0x8] sm:$0xff]
  %v55 = vld [vmem:[%s6] sm:$0x1]
  %v56 = vld [vmem:[%s7] sm:$0xff]
  %v57 = vld [vmem:[%s7 + $0x8] sm:$0xff]
  %v58 = vld [vmem:[%s7 + $0x10] sm:$0xff]
  %v59 = vld [vmem:[%s7 + $0x18] sm:$0xff]
  %v60 = vld [vmem:[%s8] sm:$0x1]
  %vm61 = vcmp.ne.f32.partialorder %v40, %v40
  %vm62 = vcmp.ne.f32.partialorder %v41, %v41
  %vm63 = vcmp.ne.f32.partialorder %v42, %v42
  %vm64 = vcmp.ne.f32.partialorder %v43, %v43
  %vm65 = vcmp.ne.f32.partialorder %v44, %v44
  %vm66 = vcmp.ne.f32.partialorder %v45, %v45
  %vm67 = vcmp.ne.f32.partialorder %v46, %v46
  %vm68 = vcmp.ne.f32.partialorder %v47, %v47
  %v69 = vsel %vm61, 0.0, 1.0
  %v70 = vsel %vm62, 0.0, 1.0
  %v71 = vsel %vm63, 0.0, 1.0
  %v72 = vsel %vm64, 0.0, 1.0
  %v73 = vsel %vm65, 0.0, 1.0
  %v74 = vsel %vm66, 0.0, 1.0
  %v75 = vsel %vm67, 0.0, 1.0
  %v76 = vsel %vm68, 0.0, 1.0
  %v77 = vsub.f32 1.0, %v69
  %v78 = vsub.f32 1.0, %v70
  %v79 = vsub.f32 1.0, %v71
  %v80 = vsub.f32 1.0, %v72
  %v81 = vsub.f32 1.0, %v73
  %v82 = vsub.f32 1.0, %v74
  %v83 = vsub.f32 1.0, %v75
  %v84 = vsub.f32 1.0, %v76
  %v85 = vsel %vm61, 0.0, %v40
  %v86 = vsel %vm62, 0.0, %v41
  %v87 = vsel %vm63, 0.0, %v42
  %v88 = vsel %vm64, 0.0, %v43
  %v89 = vsel %vm65, 0.0, %v44
  %v90 = vsel %vm66, 0.0, %v45
  %v91 = vsel %vm67, 0.0, %v46
  %v92 = vsel %vm68, 0.0, %v47
  %v93 = vsub.f32 0.0, %v50
  %v94 = vsub.f32 0.0, %v51
  %v95 = vmul.f32 %v93, 1.442695
  %v96 = vpow.pop %v95
  %v97 = vmul.f32 %v94, 1.442695
  %v98 = vpow.pop %v97
  %v99 = vmul.f32 %v50, 1.442695
  %v100 = vpow.pop %v99
  %v101 = vmul.f32 %v51, 1.442695
  %v102 = vpow.pop %v101
  %v103 = vmul.f32 %v53, %v53
  %v104 = vmul.f32 %v54, %v54
  %v106 = vlaneseq
  %v107 = vshrl.u32 %v106, 7
  %v108 = vsub.s32 0, %v107
  %v109 = vrot.slane %v55, %v108
  %vm111 = vcmask 130048
  %v113 = vsel %vm111, %v85, 0
  %v116 = vsel %vm111, %v86, 0
  %v119 = vsel %vm111, %v87, 0
  %v122 = vsel %vm111, %v88, 0
  %v125 = vsel %vm111, %v89, 0
  %v128 = vsel %vm111, %v90, 0
  %v131 = vsel %vm111, %v91, 0
  %v134 = vsel %vm111, %v92, 0
  %136 = vmatprep.subr.mxu0 0.0
  %137 = vmatpush1.msra.mxu0 %v53
  %138 = vmatprep.subr.mxu0 0.0
  %139 = vmatpush1.msra.mxu0 %v54
  %140 = vmatprep.subr.mxu0 0.0
  %141 = vmatpush1.msra.mxu0 0.0
  %142 = vmatprep.subr.mxu0 0.0
  %143 = vmatpush1.msra.mxu0 0.0
  %144 = vmatprep.subr.mxu0 0.0
  %145 = vmatpush1.msra.mxu0 0.0
  %146 = vmatprep.subr.mxu0 0.0
  %147 = vmatpush1.msra.mxu0 0.0
  %148 = vmatprep.subr.mxu0 0.0
  %149 = vmatpush1.msra.mxu0 0.0
  %150 = vmatprep.subr.mxu0 0.0
  %151 = vmatpush1.msra.mxu0 0.0
  %152 = vmatprep.subr.mxu0 0.0
  %153 = vmatpush1.msra.mxu0 0.0
  %154 = vmatprep.subr.mxu0 0.0
  %155 = vmatpush1.msra.mxu0 0.0
  %156 = vmatprep.subr.mxu0 0.0
  %157 = vmatpush1.msra.mxu0 0.0
  %158 = vmatprep.subr.mxu0 0.0
  %159 = vmatpush1.msra.mxu0 0.0
  %160 = vmatprep.subr.mxu0 0.0
  %161 = vmatpush1.msra.mxu0 0.0
  %162 = vmatprep.subr.mxu0 0.0
  %163 = vmatpush1.msra.mxu0 0.0
  %164 = vmatprep.subr.mxu0 0.0
  %165 = vmatpush1.msra.mxu0 0.0
  %166 = vmatprep.subr.mxu0 0.0
  %167 = vmatpush1.msra.mxu0 0.0
  %168 = vmatprep.subr.mxu0 0.0
  %169 = vmatpush1.msra.mxu0 0.0
  %170 = vmatprep.subr.mxu0 0.0
  %171 = vmatpush1.msra.mxu0 0.0
  %172 = vmatprep.subr.mxu0 0.0
  %173 = vmatpush1.msra.mxu0 0.0
  %174 = vmatprep.subr.mxu0 0.0
  %175 = vmatpush1.msra.mxu0 0.0
  %176 = vmatprep.subr.mxu0 0.0
  %177 = vmatpush1.msra.mxu0 0.0
  %178 = vmatprep.subr.mxu0 0.0
  %179 = vmatpush1.msra.mxu0 0.0
  %180 = vmatprep.subr.mxu0 0.0
  %181 = vmatpush1.msra.mxu0 0.0
  %182 = vmatprep.subr.mxu0 0.0
  %183 = vmatpush1.msra.mxu0 0.0
  %184 = vmatprep.subr.mxu0 0.0
  %185 = vmatpush1.msra.mxu0 0.0
  %186 = vmatprep.subr.mxu0 0.0
  %187 = vmatpush1.msra.mxu0 0.0
  %188 = vmatprep.subr.mxu0 0.0
  %189 = vmatpush1.msra.mxu0 0.0
  %190 = vmatprep.subr.mxu0 0.0
  %191 = vmatpush1.msra.mxu0 0.0
  %192 = vmatprep.subr.mxu0 0.0
  %193 = vmatpush1.msra.mxu0 0.0
  %194 = vmatprep.subr.mxu0 0.0
  %195 = vmatpush1.msra.mxu0 0.0
  %196 = vmatprep.subr.mxu0 0.0
  %197 = vmatpush1.msra.mxu0 0.0
  %198 = vmatprep.subr.mxu0 0.0
  %199 = vmatpush1.msra.mxu0 0.0
  %200 = vmatprep.mubr.f32.mxu0 0.0
  %201 = vmatmul.mubr.f32.gmra.mrb[0].mxu0 %v113
  %v202 = vpop.f32.mrb[0].mxu0
  %v203 = vadd.f32 %v109, %v202
  %v204 = vpop.f32.mrb[0].mxu0
  %205 = vmatprep.mubr.f32.mxu0 0.0
  %206 = vmatmul.mubr.f32.gmra.mrb[0].mxu0 %v116
  %v207 = vpop.f32.mrb[0].mxu0
  %v208 = vadd.f32 %v109, %v207
  %v209 = vpop.f32.mrb[0].mxu0
  %210 = vmatprep.mubr.f32.mxu0 0.0
  %211 = vmatmul.mubr.f32.gmra.mrb[0].mxu0 %v119
  %v212 = vpop.f32.mrb[0].mxu0
  %v213 = vadd.f32 %v109, %v212
  %v214 = vpop.f32.mrb[0].mxu0
  %215 = vmatprep.mubr.f32.mxu0 0.0
  %216 = vmatmul.mubr.f32.gmra.mrb[0].mxu0 %v122
  %v217 = vpop.f32.mrb[0].mxu0
  %v218 = vadd.f32 %v109, %v217
  %v219 = vpop.f32.mrb[0].mxu0
  %220 = vmatprep.mubr.f32.mxu0 0.0
  %221 = vmatmul.mubr.f32.gmra.mrb[0].mxu0 %v125
  %v222 = vpop.f32.mrb[0].mxu0
  %v223 = vadd.f32 %v109, %v222
  %v224 = vpop.f32.mrb[0].mxu0
  %225 = vmatprep.mubr.f32.mxu0 0.0
  %226 = vmatmul.mubr.f32.gmra.mrb[0].mxu0 %v128
  %v227 = vpop.f32.mrb[0].mxu0
  %v228 = vadd.f32 %v109, %v227
  %v229 = vpop.f32.mrb[0].mxu0
  %230 = vmatprep.mubr.f32.mxu0 0.0
  %231 = vmatmul.mubr.f32.gmra.mrb[0].mxu0 %v131
  %v232 = vpop.f32.mrb[0].mxu0
  %v233 = vadd.f32 %v109, %v232
  %v234 = vpop.f32.mrb[0].mxu0
  %235 = vmatprep.mubr.f32.mxu0 0.0
  %236 = vmatmul.mubr.f32.gmra.mrb[0].mxu0 %v134
  %v237 = vpop.f32.mrb[0].mxu0
  %v238 = vadd.f32 %v109, %v237
  %v239 = vpop.f32.mrb[0].mxu0
  %240 = vdwg.mxu0
  %242 = vset.pattern.permute.xlu0 0
  %243 = vperm.xlu0 %242, %v48
  %v244 = vpop.permute.xlu0 %243
  %247 = vset.pattern.permute.xlu0 0
  %248 = vperm.xlu0 %247, %v49
  %v249 = vpop.permute.xlu0 %248
  %v251 = vmul.f32 %v244, %v53
  %v252 = vmul.f32 %v249, %v54
  %253 = vset.pattern.permute.xlu0 1
  %254 = vperm.xlu0 %253, %v48
  %v255 = vpop.permute.xlu0 %254
  %257 = vset.pattern.permute.xlu0 1
  %258 = vperm.xlu0 %257, %v49
  %v259 = vpop.permute.xlu0 %258
  %v261 = vmul.f32 %v255, %v53
  %v262 = vmul.f32 %v259, %v54
  %263 = vset.pattern.permute.xlu0 2
  %264 = vperm.xlu0 %263, %v48
  %v265 = vpop.permute.xlu0 %264
  %267 = vset.pattern.permute.xlu0 2
  %268 = vperm.xlu0 %267, %v49
  %v269 = vpop.permute.xlu0 %268
  %v271 = vmul.f32 %v265, %v53
  %v272 = vmul.f32 %v269, %v54
  %273 = vset.pattern.permute.xlu0 3
  %274 = vperm.xlu0 %273, %v48
  %v275 = vpop.permute.xlu0 %274
  %277 = vset.pattern.permute.xlu0 3
  %278 = vperm.xlu0 %277, %v49
  %v279 = vpop.permute.xlu0 %278
  %v281 = vmul.f32 %v275, %v53
  %v282 = vmul.f32 %v279, %v54
  %283 = vset.pattern.permute.xlu0 4
  %284 = vperm.xlu0 %283, %v48
  %v285 = vpop.permute.xlu0 %284
  %287 = vset.pattern.permute.xlu0 4
  %288 = vperm.xlu0 %287, %v49
  %v289 = vpop.permute.xlu0 %288
  %v291 = vmul.f32 %v285, %v53
  %v292 = vmul.f32 %v289, %v54
  %295 = vrot.lane.b32.xlu0 %v261, 32
  %v296 = vpop.permute.xlu0 %295
  %297 = vrot.lane.b32.xlu0 %v262, 32
  %v298 = vpop.permute.xlu0 %297
  %303 = vrot.lane.b32.xlu0 %v271, 64
  %v304 = vpop.permute.xlu0 %303
  %305 = vrot.lane.b32.xlu0 %v272, 64
  %v306 = vpop.permute.xlu0 %305
  %311 = vrot.lane.b32.xlu0 %v281, 96
  %v312 = vpop.permute.xlu0 %311
  %313 = vrot.lane.b32.xlu0 %v282, 96
  %v314 = vpop.permute.xlu0 %313
  %vm317 = vcmask 261120
  %v318 = vsel %vm317, %v251, %v296
  %v319 = vsel %vm317, %v252, %v298
  %vm320 = vcmask 523264
  %v321 = vsel %vm320, %v318, %v304
  %v322 = vsel %vm320, %v319, %v306
  %vm323 = vcmask 785408
  %v324 = vsel %vm323, %v321, %v312
  %v325 = vsel %vm323, %v322, %v314
  %327 = vset.pattern.permute.xlu0 0
  %328 = vperm.xlu0 %327, %v100
  %v329 = vpop.permute.xlu0 %328
  %332 = vset.pattern.permute.xlu0 0
  %333 = vperm.xlu0 %332, %v102
  %v334 = vpop.permute.xlu0 %333
  %v336 = vmul.f32 %v329, %v103
  %v337 = vmul.f32 %v334, %v104
  %338 = vset.pattern.permute.xlu0 1
  %339 = vperm.xlu0 %338, %v100
  %v340 = vpop.permute.xlu0 %339
  %342 = vset.pattern.permute.xlu0 1
  %343 = vperm.xlu0 %342, %v102
  %v344 = vpop.permute.xlu0 %343
  %v346 = vmul.f32 %v340, %v103
  %v347 = vmul.f32 %v344, %v104
  %348 = vset.pattern.permute.xlu0 2
  %349 = vperm.xlu0 %348, %v100
  %v350 = vpop.permute.xlu0 %349
  %352 = vset.pattern.permute.xlu0 2
  %353 = vperm.xlu0 %352, %v102
  %v354 = vpop.permute.xlu0 %353
  %v356 = vmul.f32 %v350, %v103
  %v357 = vmul.f32 %v354, %v104
  %358 = vset.pattern.permute.xlu0 3
  %359 = vperm.xlu0 %358, %v100
  %v360 = vpop.permute.xlu0 %359
  %362 = vset.pattern.permute.xlu0 3
  %363 = vperm.xlu0 %362, %v102
  %v364 = vpop.permute.xlu0 %363
  %v366 = vmul.f32 %v360, %v103
  %v367 = vmul.f32 %v364, %v104
  %368 = vset.pattern.permute.xlu0 4
  %369 = vperm.xlu0 %368, %v100
  %v370 = vpop.permute.xlu0 %369
  %372 = vset.pattern.permute.xlu0 4
  %373 = vperm.xlu0 %372, %v102
  %v374 = vpop.permute.xlu0 %373
  %v376 = vmul.f32 %v370, %v103
  %v377 = vmul.f32 %v374, %v104
  %380 = vrot.lane.b32.xlu0 %v346, 32
  %v381 = vpop.permute.xlu0 %380
  %382 = vrot.lane.b32.xlu0 %v347, 32
  %v383 = vpop.permute.xlu0 %382
  %388 = vrot.lane.b32.xlu0 %v356, 64
  %v389 = vpop.permute.xlu0 %388
  %390 = vrot.lane.b32.xlu0 %v357, 64
  %v391 = vpop.permute.xlu0 %390
  %396 = vrot.lane.b32.xlu0 %v366, 96
  %v397 = vpop.permute.xlu0 %396
  %398 = vrot.lane.b32.xlu0 %v367, 96
  %v399 = vpop.permute.xlu0 %398
  %v402 = vsel %vm317, %v336, %v381
  %v403 = vsel %vm317, %v337, %v383
  %v404 = vsel %vm320, %v402, %v389
  %v405 = vsel %vm320, %v403, %v391
  %v406 = vsel %vm323, %v404, %v397
  %v407 = vsel %vm323, %v405, %v399
  %412 = vrot.lane.b32.xlu0 %v406, 32
  %v413 = vpop.permute.xlu0 %412
  %414 = vrot.lane.b32.xlu0 %v376, 32
  %v415 = vpop.permute.xlu0 %414
  %416 = vrot.lane.b32.xlu0 %v407, 32
  %v417 = vpop.permute.xlu0 %416
  %418 = vrot.lane.b32.xlu0 %v377, 32
  %v419 = vpop.permute.xlu0 %418
  %v420 = vsel %vm317, %v413, %v415
  %v421 = vsel %vm317, %v417, %v419
  %v426 = vsel %vm317, %v291, %v413
  %v427 = vsel %vm317, %v292, %v417
  %v429 = vsel %vm111, %v77, 0
  %v432 = vsel %vm111, %v78, 0
  %v435 = vsel %vm111, %v79, 0
  %v438 = vsel %vm111, %v80, 0
  %v441 = vsel %vm111, %v81, 0
  %v444 = vsel %vm111, %v82, 0
  %v447 = vsel %vm111, %v83, 0
  %v450 = vsel %vm111, %v84, 0
  %452 = vmatprep.subr.mxu0 %v426
  %453 = vmatpush1.msra.mxu0 %v324
  %454 = vmatprep.subr.mxu0 %v427
  %455 = vmatpush1.msra.mxu0 %v325
  %456 = vmatprep.subr.mxu0 0.0
  %457 = vmatpush1.msra.mxu0 0.0
  %458 = vmatprep.subr.mxu0 0.0
  %459 = vmatpush1.msra.mxu0 0.0
  %460 = vmatprep.subr.mxu0 0.0
  %461 = vmatpush1.msra.mxu0 0.0
  %462 = vmatprep.subr.mxu0 0.0
  %463 = vmatpush1.msra.mxu0 0.0
  %464 = vmatprep.subr.mxu0 0.0
  %465 = vmatpush1.msra.mxu0 0.0
  %466 = vmatprep.subr.mxu0 0.0
  %467 = vmatpush1.msra.mxu0 0.0
  %468 = vmatprep.subr.mxu0 0.0
  %469 = vmatpush1.msra.mxu0 0.0
  %470 = vmatprep.subr.mxu0 0.0
  %471 = vmatpush1.msra.mxu0 0.0
  %472 = vmatprep.subr.mxu0 0.0
  %473 = vmatpush1.msra.mxu0 0.0
  %474 = vmatprep.subr.mxu0 0.0
  %475 = vmatpush1.msra.mxu0 0.0
  %476 = vmatprep.subr.mxu0 0.0
  %477 = vmatpush1.msra.mxu0 0.0
  %478 = vmatprep.subr.mxu0 0.0
  %479 = vmatpush1.msra.mxu0 0.0
  %480 = vmatprep.subr.mxu0 0.0
  %481 = vmatpush1.msra.mxu0 0.0
  %482 = vmatprep.subr.mxu0 0.0
  %483 = vmatpush1.msra.mxu0 0.0
  %484 = vmatprep.subr.mxu0 0.0
  %485 = vmatpush1.msra.mxu0 0.0
  %486 = vmatprep.subr.mxu0 0.0
  %487 = vmatpush1.msra.mxu0 0.0
  %488 = vmatprep.subr.mxu0 0.0
  %489 = vmatpush1.msra.mxu0 0.0
  %490 = vmatprep.subr.mxu0 0.0
  %491 = vmatpush1.msra.mxu0 0.0
  %492 = vmatprep.subr.mxu0 0.0
  %493 = vmatpush1.msra.mxu0 0.0
  %494 = vmatprep.subr.mxu0 0.0
  %495 = vmatpush1.msra.mxu0 0.0
  %496 = vmatprep.subr.mxu0 0.0
  %497 = vmatpush1.msra.mxu0 0.0
  %498 = vmatprep.subr.mxu0 0.0
  %499 = vmatpush1.msra.mxu0 0.0
  %500 = vmatprep.subr.mxu0 0.0
  %501 = vmatpush1.msra.mxu0 0.0
  %502 = vmatprep.subr.mxu0 0.0
  %503 = vmatpush1.msra.mxu0 0.0
  %504 = vmatprep.subr.mxu0 0.0
  %505 = vmatpush1.msra.mxu0 0.0
  %506 = vmatprep.subr.mxu0 0.0
  %507 = vmatpush1.msra.mxu0 0.0
  %508 = vmatprep.subr.mxu0 0.0
  %509 = vmatpush1.msra.mxu0 0.0
  %510 = vmatprep.subr.mxu0 0.0
  %511 = vmatpush1.msra.mxu0 0.0
  %512 = vmatprep.subr.mxu0 0.0
  %513 = vmatpush1.msra.mxu0 0.0
  %514 = vmatprep.subr.mxu0 0.0
  %515 = vmatpush1.msra.mxu0 0.0
  %516 = vmatprep.mubr.f32.mxu0 0.0
  %517 = vmatmul.mubr.f32.gmra.mrb[0].mxu0 %v429
  %v518 = vpop.f32.mrb[0].mxu0
  %v519 = vadd.f32 0.0, %v518
  %v520 = vpop.f32.mrb[0].mxu0
  %v521 = vadd.f32 0.0, %v520
  %522 = vmatprep.mubr.f32.mxu0 0.0
  %523 = vmatmul.mubr.f32.gmra.mrb[0].mxu0 %v432
  %v524 = vpop.f32.mrb[0].mxu0
  %v525 = vadd.f32 0.0, %v524
  %v526 = vpop.f32.mrb[0].mxu0
  %v527 = vadd.f32 0.0, %v526
  %528 = vmatprep.mubr.f32.mxu0 0.0
  %529 = vmatmul.mubr.f32.gmra.mrb[0].mxu0 %v435
  %v530 = vpop.f32.mrb[0].mxu0
  %v531 = vadd.f32 0.0, %v530
  %v532 = vpop.f32.mrb[0].mxu0
  %v533 = vadd.f32 0.0, %v532
  %534 = vmatprep.mubr.f32.mxu0 0.0
  %535 = vmatmul.mubr.f32.gmra.mrb[0].mxu0 %v438
  %v536 = vpop.f32.mrb[0].mxu0
  %v537 = vadd.f32 0.0, %v536
  %v538 = vpop.f32.mrb[0].mxu0
  %v539 = vadd.f32 0.0, %v538
  %540 = vmatprep.mubr.f32.mxu0 0.0
  %541 = vmatmul.mubr.f32.gmra.mrb[0].mxu0 %v441
  %v542 = vpop.f32.mrb[0].mxu0
  %v543 = vadd.f32 0.0, %v542
  %v544 = vpop.f32.mrb[0].mxu0
  %v545 = vadd.f32 0.0, %v544
  %546 = vmatprep.mubr.f32.mxu0 0.0
  %547 = vmatmul.mubr.f32.gmra.mrb[0].mxu0 %v444
  %v548 = vpop.f32.mrb[0].mxu0
  %v549 = vadd.f32 0.0, %v548
  %v550 = vpop.f32.mrb[0].mxu0
  %v551 = vadd.f32 0.0, %v550
  %552 = vmatprep.mubr.f32.mxu0 0.0
  %553 = vmatmul.mubr.f32.gmra.mrb[0].mxu0 %v447
  %v554 = vpop.f32.mrb[0].mxu0
  %v555 = vadd.f32 0.0, %v554
  %v556 = vpop.f32.mrb[0].mxu0
  %v557 = vadd.f32 0.0, %v556
  %558 = vmatprep.mubr.f32.mxu0 0.0
  %559 = vmatmul.mubr.f32.gmra.mrb[0].mxu0 %v450
  %v560 = vpop.f32.mrb[0].mxu0
  %v561 = vadd.f32 0.0, %v560
  %v562 = vpop.f32.mrb[0].mxu0
  %v563 = vadd.f32 0.0, %v562
  %564 = vdwg.mxu0
  %565 = vmatprep.subr.mxu0 0.0
  %566 = vmatpush1.msra.mxu0 %v420
  %567 = vmatprep.subr.mxu0 0.0
  %568 = vmatpush1.msra.mxu0 %v421
  %569 = vmatprep.subr.mxu0 0.0
  %570 = vmatpush1.msra.mxu0 0.0
  %571 = vmatprep.subr.mxu0 0.0
  %572 = vmatpush1.msra.mxu0 0.0
  %573 = vmatprep.subr.mxu0 0.0
  %574 = vmatpush1.msra.mxu0 0.0
  %575 = vmatprep.subr.mxu0 0.0
  %576 = vmatpush1.msra.mxu0 0.0
  %577 = vmatprep.subr.mxu0 0.0
  %578 = vmatpush1.msra.mxu0 0.0
  %579 = vmatprep.subr.mxu0 0.0
  %580 = vmatpush1.msra.mxu0 0.0
  %581 = vmatprep.subr.mxu0 0.0
  %582 = vmatpush1.msra.mxu0 0.0
  %583 = vmatprep.subr.mxu0 0.0
  %584 = vmatpush1.msra.mxu0 0.0
  %585 = vmatprep.subr.mxu0 0.0
  %586 = vmatpush1.msra.mxu0 0.0
  %587 = vmatprep.subr.mxu0 0.0
  %588 = vmatpush1.msra.mxu0 0.0
  %589 = vmatprep.subr.mxu0 0.0
  %590 = vmatpush1.msra.mxu0 0.0
  %591 = vmatprep.subr.mxu0 0.0
  %592 = vmatpush1.msra.mxu0 0.0
  %593 = vmatprep.subr.mxu0 0.0
  %594 = vmatpush1.msra.mxu0 0.0
  %595 = vmatprep.subr.mxu0 0.0
  %596 = vmatpush1.msra.mxu0 0.0
  %597 = vmatprep.subr.mxu0 0.0
  %598 = vmatpush1.msra.mxu0 0.0
  %599 = vmatprep.subr.mxu0 0.0
  %600 = vmatpush1.msra.mxu0 0.0
  %601 = vmatprep.subr.mxu0 0.0
  %602 = vmatpush1.msra.mxu0 0.0
  %603 = vmatprep.subr.mxu0 0.0
  %604 = vmatpush1.msra.mxu0 0.0
  %605 = vmatprep.subr.mxu0 0.0
  %606 = vmatpush1.msra.mxu0 0.0
  %607 = vmatprep.subr.mxu0 0.0
  %608 = vmatpush1.msra.mxu0 0.0
  %609 = vmatprep.subr.mxu0 0.0
  %610 = vmatpush1.msra.mxu0 0.0
  %611 = vmatprep.subr.mxu0 0.0
  %612 = vmatpush1.msra.mxu0 0.0
  %613 = vmatprep.subr.mxu0 0.0
  %614 = vmatpush1.msra.mxu0 0.0
  %615 = vmatprep.subr.mxu0 0.0
  %616 = vmatpush1.msra.mxu0 0.0
  %617 = vmatprep.subr.mxu0 0.0
  %618 = vmatpush1.msra.mxu0 0.0
  %619 = vmatprep.subr.mxu0 0.0
  %620 = vmatpush1.msra.mxu0 0.0
  %621 = vmatprep.subr.mxu0 0.0
  %622 = vmatpush1.msra.mxu0 0.0
  %623 = vmatprep.subr.mxu0 0.0
  %624 = vmatpush1.msra.mxu0 0.0
  %625 = vmatprep.subr.mxu0 0.0
  %626 = vmatpush1.msra.mxu0 0.0
  %627 = vmatprep.subr.mxu0 0.0
  %628 = vmatpush1.msra.mxu0 0.0
  %629 = vmatprep.mubr.f32.mxu0 0.0
  %630 = vmatmul.mubr.f32.gmra.mrb[0].mxu0 %v429
  %v631 = vpop.f32.mrb[0].mxu0
  %v632 = vadd.f32 0.0, %v631
  %v633 = vpop.f32.mrb[0].mxu0
  %634 = vmatprep.mubr.f32.mxu0 0.0
  %635 = vmatmul.mubr.f32.gmra.mrb[0].mxu0 %v432
  %v636 = vpop.f32.mrb[0].mxu0
  %v637 = vadd.f32 0.0, %v636
  %v638 = vpop.f32.mrb[0].mxu0
  %639 = vmatprep.mubr.f32.mxu0 0.0
  %640 = vmatmul.mubr.f32.gmra.mrb[0].mxu0 %v435
  %v641 = vpop.f32.mrb[0].mxu0
  %v642 = vadd.f32 0.0, %v641
  %v643 = vpop.f32.mrb[0].mxu0
  %644 = vmatprep.mubr.f32.mxu0 0.0
  %645 = vmatmul.mubr.f32.gmra.mrb[0].mxu0 %v438
  %v646 = vpop.f32.mrb[0].mxu0
  %v647 = vadd.f32 0.0, %v646
  %v648 = vpop.f32.mrb[0].mxu0
  %649 = vmatprep.mubr.f32.mxu0 0.0
  %650 = vmatmul.mubr.f32.gmra.mrb[0].mxu0 %v441
  %v651 = vpop.f32.mrb[0].mxu0
  %v652 = vadd.f32 0.0, %v651
  %v653 = vpop.f32.mrb[0].mxu0
  %654 = vmatprep.mubr.f32.mxu0 0.0
  %655 = vmatmul.mubr.f32.gmra.mrb[0].mxu0 %v444
  %v656 = vpop.f32.mrb[0].mxu0
  %v657 = vadd.f32 0.0, %v656
  %v658 = vpop.f32.mrb[0].mxu0
  %659 = vmatprep.mubr.f32.mxu0 0.0
  %660 = vmatmul.mubr.f32.gmra.mrb[0].mxu0 %v447
  %v661 = vpop.f32.mrb[0].mxu0
  %v662 = vadd.f32 0.0, %v661
  %v663 = vpop.f32.mrb[0].mxu0
  %664 = vmatprep.mubr.f32.mxu0 0.0
  %665 = vmatmul.mubr.f32.gmra.mrb[0].mxu0 %v450
  %v666 = vpop.f32.mrb[0].mxu0
  %v667 = vadd.f32 0.0, %v666
  %v668 = vpop.f32.mrb[0].mxu0
  %669 = vdwg.mxu0
  %694 = vrot.lane.b32.xlu0 %v519, 32
  %v695 = vpop.permute.xlu0 %694
  %696 = vrot.lane.b32.xlu0 %v521, 32
  %v697 = vpop.permute.xlu0 %696
  %698 = vrot.lane.b32.xlu0 %v632, 32
  %v699 = vpop.permute.xlu0 %698
  %700 = vrot.lane.b32.xlu0 %v525, 32
  %v701 = vpop.permute.xlu0 %700
  %702 = vrot.lane.b32.xlu0 %v527, 32
  %v703 = vpop.permute.xlu0 %702
  %704 = vrot.lane.b32.xlu0 %v637, 32
  %v705 = vpop.permute.xlu0 %704
  %706 = vrot.lane.b32.xlu0 %v531, 32
  %v707 = vpop.permute.xlu0 %706
  %708 = vrot.lane.b32.xlu0 %v533, 32
  %v709 = vpop.permute.xlu0 %708
  %710 = vrot.lane.b32.xlu0 %v642, 32
  %v711 = vpop.permute.xlu0 %710
  %712 = vrot.lane.b32.xlu0 %v537, 32
  %v713 = vpop.permute.xlu0 %712
  %714 = vrot.lane.b32.xlu0 %v539, 32
  %v715 = vpop.permute.xlu0 %714
  %716 = vrot.lane.b32.xlu0 %v647, 32
  %v717 = vpop.permute.xlu0 %716
  %718 = vrot.lane.b32.xlu0 %v543, 32
  %v719 = vpop.permute.xlu0 %718
  %720 = vrot.lane.b32.xlu0 %v545, 32
  %v721 = vpop.permute.xlu0 %720
  %722 = vrot.lane.b32.xlu0 %v652, 32
  %v723 = vpop.permute.xlu0 %722
  %724 = vrot.lane.b32.xlu0 %v549, 32
  %v725 = vpop.permute.xlu0 %724
  %726 = vrot.lane.b32.xlu0 %v551, 32
  %v727 = vpop.permute.xlu0 %726
  %728 = vrot.lane.b32.xlu0 %v657, 32
  %v729 = vpop.permute.xlu0 %728
  %730 = vrot.lane.b32.xlu0 %v555, 32
  %v731 = vpop.permute.xlu0 %730
  %732 = vrot.lane.b32.xlu0 %v557, 32
  %v733 = vpop.permute.xlu0 %732
  %734 = vrot.lane.b32.xlu0 %v662, 32
  %v735 = vpop.permute.xlu0 %734
  %736 = vrot.lane.b32.xlu0 %v561, 32
  %v737 = vpop.permute.xlu0 %736
  %738 = vrot.lane.b32.xlu0 %v563, 32
  %v739 = vpop.permute.xlu0 %738
  %740 = vrot.lane.b32.xlu0 %v667, 32
  %v741 = vpop.permute.xlu0 %740
  %v742 = vsel %vm317, %v695, %v697
  %v743 = vsel %vm317, %v697, %v699
  %v744 = vsel %vm317, %v701, %v703
  %v745 = vsel %vm317, %v703, %v705
  %v746 = vsel %vm317, %v707, %v709
  %v747 = vsel %vm317, %v709, %v711
  %v748 = vsel %vm317, %v713, %v715
  %v749 = vsel %vm317, %v715, %v717
  %v750 = vsel %vm317, %v719, %v721
  %v751 = vsel %vm317, %v721, %v723
  %v752 = vsel %vm317, %v725, %v727
  %v753 = vsel %vm317, %v727, %v729
  %v754 = vsel %vm317, %v731, %v733
  %v755 = vsel %vm317, %v733, %v735
  %v756 = vsel %vm317, %v737, %v739
  %v757 = vsel %vm317, %v739, %v741
  %v782 = vsel %vm317, %v203, %v695
  %v783 = vsel %vm317, %v208, %v701
  %v784 = vsel %vm317, %v213, %v707
  %v785 = vsel %vm317, %v218, %v713
  %v786 = vsel %vm317, %v223, %v719
  %v787 = vsel %vm317, %v228, %v725
  %v788 = vsel %vm317, %v233, %v731
  %v789 = vsel %vm317, %v238, %v737
  %v790 = vsel %vm323, %v743, 0.0
  %v791 = vsel %vm323, %v745, 0.0
  %v792 = vsel %vm323, %v747, 0.0
  %v793 = vsel %vm323, %v749, 0.0
  %v794 = vsel %vm323, %v751, 0.0
  %v795 = vsel %vm323, %v753, 0.0
  %v796 = vsel %vm323, %v755, 0.0
  %v797 = vsel %vm323, %v757, 0.0
  %v799 = vsel %vm320, %v32, 0
  %v802 = vsel %vm320, %v33, 0
  %v805 = vsel %vm320, %v34, 0
  %v808 = vsel %vm320, %v35, 0
  %v811 = vsel %vm320, %v36, 0
  %v814 = vsel %vm320, %v37, 0
  %v817 = vsel %vm320, %v38, 0
  %v820 = vsel %vm320, %v39, 0
  %822 = vmatprep.subr.mxu0 %v742
  %823 = vmatpush1.msra.mxu0 %v782
  %824 = vmatprep.subr.mxu0 %v744
  %825 = vmatpush1.msra.mxu0 %v783
  %826 = vmatprep.subr.mxu0 %v746
  %827 = vmatpush1.msra.mxu0 %v784
  %828 = vmatprep.subr.mxu0 %v748
  %829 = vmatpush1.msra.mxu0 %v785
  %830 = vmatprep.subr.mxu0 %v750
  %831 = vmatpush1.msra.mxu0 %v786
  %832 = vmatprep.subr.mxu0 %v752
  %833 = vmatpush1.msra.mxu0 %v787
  %834 = vmatprep.subr.mxu0 %v754
  %835 = vmatpush1.msra.mxu0 %v788
  %836 = vmatprep.subr.mxu0 %v756
  %837 = vmatpush1.msra.mxu0 %v789
  %838 = vmatprep.subr.mxu0 0.0
  %839 = vmatpush1.msra.mxu0 0.0
  %840 = vmatprep.subr.mxu0 0.0
  %841 = vmatpush1.msra.mxu0 0.0
  %842 = vmatprep.subr.mxu0 0.0
  %843 = vmatpush1.msra.mxu0 0.0
  %844 = vmatprep.subr.mxu0 0.0
  %845 = vmatpush1.msra.mxu0 0.0
  %846 = vmatprep.subr.mxu0 0.0
  %847 = vmatpush1.msra.mxu0 0.0
  %848 = vmatprep.subr.mxu0 0.0
  %849 = vmatpush1.msra.mxu0 0.0
  %850 = vmatprep.subr.mxu0 0.0
  %851 = vmatpush1.msra.mxu0 0.0
  %852 = vmatprep.subr.mxu0 0.0
  %853 = vmatpush1.msra.mxu0 0.0
  %854 = vmatprep.subr.mxu0 0.0
  %855 = vmatpush1.msra.mxu0 0.0
  %856 = vmatprep.subr.mxu0 0.0
  %857 = vmatpush1.msra.mxu0 0.0
  %858 = vmatprep.subr.mxu0 0.0
  %859 = vmatpush1.msra.mxu0 0.0
  %860 = vmatprep.subr.mxu0 0.0
  %861 = vmatpush1.msra.mxu0 0.0
  %862 = vmatprep.subr.mxu0 0.0
  %863 = vmatpush1.msra.mxu0 0.0
  %864 = vmatprep.subr.mxu0 0.0
  %865 = vmatpush1.msra.mxu0 0.0
  %866 = vmatprep.subr.mxu0 0.0
  %867 = vmatpush1.msra.mxu0 0.0
  %868 = vmatprep.subr.mxu0 0.0
  %869 = vmatpush1.msra.mxu0 0.0
  %870 = vmatprep.subr.mxu0 0.0
  %871 = vmatpush1.msra.mxu0 0.0
  %872 = vmatprep.subr.mxu0 0.0
  %873 = vmatpush1.msra.mxu0 0.0
  %874 = vmatprep.subr.mxu0 0.0
  %875 = vmatpush1.msra.mxu0 0.0
  %876 = vmatprep.subr.mxu0 0.0
  %877 = vmatpush1.msra.mxu0 0.0
  %878 = vmatprep.subr.mxu0 0.0
  %879 = vmatpush1.msra.mxu0 0.0
  %880 = vmatprep.subr.mxu0 0.0
  %881 = vmatpush1.msra.mxu0 0.0
  %882 = vmatprep.subr.mxu0 0.0
  %883 = vmatpush1.msra.mxu0 0.0
  %884 = vmatprep.subr.mxu0 0.0
  %885 = vmatpush1.msra.mxu0 0.0
  %886 = vmatprep.mubr.f32.mxu0 0.0
  %887 = vmatmul.mubr.f32.gmra.mrb[0].mxu0 %v799
  %v888 = vpop.f32.mrb[0].mxu0
  %v889 = vadd.f32 0.0, %v888
  %v890 = vpop.f32.mrb[0].mxu0
  %v891 = vadd.f32 0.0, %v890
  %892 = vmatprep.mubr.f32.mxu0 0.0
  %893 = vmatmul.mubr.f32.gmra.mrb[0].mxu0 %v802
  %v894 = vpop.f32.mrb[0].mxu0
  %v895 = vadd.f32 0.0, %v894
  %v896 = vpop.f32.mrb[0].mxu0
  %v897 = vadd.f32 0.0, %v896
  %898 = vmatprep.mubr.f32.mxu0 0.0
  %899 = vmatmul.mubr.f32.gmra.mrb[0].mxu0 %v805
  %v900 = vpop.f32.mrb[0].mxu0
  %v901 = vadd.f32 0.0, %v900
  %v902 = vpop.f32.mrb[0].mxu0
  %v903 = vadd.f32 0.0, %v902
  %904 = vmatprep.mubr.f32.mxu0 0.0
  %905 = vmatmul.mubr.f32.gmra.mrb[0].mxu0 %v808
  %v906 = vpop.f32.mrb[0].mxu0
  %v907 = vadd.f32 0.0, %v906
  %v908 = vpop.f32.mrb[0].mxu0
  %v909 = vadd.f32 0.0, %v908
  %910 = vmatprep.mubr.f32.mxu0 0.0
  %911 = vmatmul.mubr.f32.gmra.mrb[0].mxu0 %v811
  %v912 = vpop.f32.mrb[0].mxu0
  %v913 = vadd.f32 0.0, %v912
  %v914 = vpop.f32.mrb[0].mxu0
  %v915 = vadd.f32 0.0, %v914
  %916 = vmatprep.mubr.f32.mxu0 0.0
  %917 = vmatmul.mubr.f32.gmra.mrb[0].mxu0 %v814
  %v918 = vpop.f32.mrb[0].mxu0
  %v919 = vadd.f32 0.0, %v918
  %v920 = vpop.f32.mrb[0].mxu0
  %v921 = vadd.f32 0.0, %v920
  %922 = vmatprep.mubr.f32.mxu0 0.0
  %923 = vmatmul.mubr.f32.gmra.mrb[0].mxu0 %v817
  %v924 = vpop.f32.mrb[0].mxu0
  %v925 = vadd.f32 0.0, %v924
  %v926 = vpop.f32.mrb[0].mxu0
  %v927 = vadd.f32 0.0, %v926
  %928 = vmatprep.mubr.f32.mxu0 0.0
  %929 = vmatmul.mubr.f32.gmra.mrb[0].mxu0 %v820
  %v930 = vpop.f32.mrb[0].mxu0
  %v931 = vadd.f32 0.0, %v930
  %v932 = vpop.f32.mrb[0].mxu0
  %v933 = vadd.f32 0.0, %v932
  %934 = vdwg.mxu0
  %935 = vmatprep.subr.mxu0 0.0
  %936 = vmatpush1.msra.mxu0 %v790
  %937 = vmatprep.subr.mxu0 0.0
  %938 = vmatpush1.msra.mxu0 %v791
  %939 = vmatprep.subr.mxu0 0.0
  %940 = vmatpush1.msra.mxu0 %v792
  %941 = vmatprep.subr.mxu0 0.0
  %942 = vmatpush1.msra.mxu0 %v793
  %943 = vmatprep.subr.mxu0 0.0
  %944 = vmatpush1.msra.mxu0 %v794
  %945 = vmatprep.subr.mxu0 0.0
  %946 = vmatpush1.msra.mxu0 %v795
  %947 = vmatprep.subr.mxu0 0.0
  %948 = vmatpush1.msra.mxu0 %v796
  %949 = vmatprep.subr.mxu0 0.0
  %950 = vmatpush1.msra.mxu0 %v797
  %951 = vmatprep.subr.mxu0 0.0
  %952 = vmatpush1.msra.mxu0 0.0
  %953 = vmatprep.subr.mxu0 0.0
  %954 = vmatpush1.msra.mxu0 0.0
  %955 = vmatprep.subr.mxu0 0.0
  %956 = vmatpush1.msra.mxu0 0.0
  %957 = vmatprep.subr.mxu0 0.0
  %958 = vmatpush1.msra.mxu0 0.0
  %959 = vmatprep.subr.mxu0 0.0
  %960 = vmatpush1.msra.mxu0 0.0
  %961 = vmatprep.subr.mxu0 0.0
  %962 = vmatpush1.msra.mxu0 0.0
  %963 = vmatprep.subr.mxu0 0.0
  %964 = vmatpush1.msra.mxu0 0.0
  %965 = vmatprep.subr.mxu0 0.0
  %966 = vmatpush1.msra.mxu0 0.0
  %967 = vmatprep.subr.mxu0 0.0
  %968 = vmatpush1.msra.mxu0 0.0
  %969 = vmatprep.subr.mxu0 0.0
  %970 = vmatpush1.msra.mxu0 0.0
  %971 = vmatprep.subr.mxu0 0.0
  %972 = vmatpush1.msra.mxu0 0.0
  %973 = vmatprep.subr.mxu0 0.0
  %974 = vmatpush1.msra.mxu0 0.0
  %975 = vmatprep.subr.mxu0 0.0
  %976 = vmatpush1.msra.mxu0 0.0
  %977 = vmatprep.subr.mxu0 0.0
  %978 = vmatpush1.msra.mxu0 0.0
  %979 = vmatprep.subr.mxu0 0.0
  %980 = vmatpush1.msra.mxu0 0.0
  %981 = vmatprep.subr.mxu0 0.0
  %982 = vmatpush1.msra.mxu0 0.0
  %983 = vmatprep.subr.mxu0 0.0
  %984 = vmatpush1.msra.mxu0 0.0
  %985 = vmatprep.subr.mxu0 0.0
  %986 = vmatpush1.msra.mxu0 0.0
  %987 = vmatprep.subr.mxu0 0.0
  %988 = vmatpush1.msra.mxu0 0.0
  %989 = vmatprep.subr.mxu0 0.0
  %990 = vmatpush1.msra.mxu0 0.0
  %991 = vmatprep.subr.mxu0 0.0
  %992 = vmatpush1.msra.mxu0 0.0
  %993 = vmatprep.subr.mxu0 0.0
  %994 = vmatpush1.msra.mxu0 0.0
  %995 = vmatprep.subr.mxu0 0.0
  %996 = vmatpush1.msra.mxu0 0.0
  %997 = vmatprep.subr.mxu0 0.0
  %998 = vmatpush1.msra.mxu0 0.0
  %999 = vmatprep.mubr.f32.mxu0 0.0
  %1000 = vmatmul.mubr.f32.gmra.mrb[0].mxu0 %v799
  %v1001 = vpop.f32.mrb[0].mxu0
  %v1002 = vadd.f32 0.0, %v1001
  %v1003 = vpop.f32.mrb[0].mxu0
  %1004 = vmatprep.mubr.f32.mxu0 0.0
  %1005 = vmatmul.mubr.f32.gmra.mrb[0].mxu0 %v802
  %v1006 = vpop.f32.mrb[0].mxu0
  %v1007 = vadd.f32 0.0, %v1006
  %v1008 = vpop.f32.mrb[0].mxu0
  %1009 = vmatprep.mubr.f32.mxu0 0.0
  %1010 = vmatmul.mubr.f32.gmra.mrb[0].mxu0 %v805
  %v1011 = vpop.f32.mrb[0].mxu0
  %v1012 = vadd.f32 0.0, %v1011
  %v1013 = vpop.f32.mrb[0].mxu0
  %1014 = vmatprep.mubr.f32.mxu0 0.0
  %1015 = vmatmul.mubr.f32.gmra.mrb[0].mxu0 %v808
  %v1016 = vpop.f32.mrb[0].mxu0
  %v1017 = vadd.f32 0.0, %v1016
  %v1018 = vpop.f32.mrb[0].mxu0
  %1019 = vmatprep.mubr.f32.mxu0 0.0
  %1020 = vmatmul.mubr.f32.gmra.mrb[0].mxu0 %v811
  %v1021 = vpop.f32.mrb[0].mxu0
  %v1022 = vadd.f32 0.0, %v1021
  %v1023 = vpop.f32.mrb[0].mxu0
  %1024 = vmatprep.mubr.f32.mxu0 0.0
  %1025 = vmatmul.mubr.f32.gmra.mrb[0].mxu0 %v814
  %v1026 = vpop.f32.mrb[0].mxu0
  %v1027 = vadd.f32 0.0, %v1026
  %v1028 = vpop.f32.mrb[0].mxu0
  %1029 = vmatprep.mubr.f32.mxu0 0.0
  %1030 = vmatmul.mubr.f32.gmra.mrb[0].mxu0 %v817
  %v1031 = vpop.f32.mrb[0].mxu0
  %v1032 = vadd.f32 0.0, %v1031
  %v1033 = vpop.f32.mrb[0].mxu0
  %1034 = vmatprep.mubr.f32.mxu0 0.0
  %1035 = vmatmul.mubr.f32.gmra.mrb[0].mxu0 %v820
  %v1036 = vpop.f32.mrb[0].mxu0
  %v1037 = vadd.f32 0.0, %v1036
  %v1038 = vpop.f32.mrb[0].mxu0
  %1039 = vdwg.mxu0
  %1048 = vrot.lane.b32.xlu0 %v889, 32
  %v1049 = vpop.permute.xlu0 %1048
  %1050 = vrot.lane.b32.xlu0 %v895, 32
  %v1051 = vpop.permute.xlu0 %1050
  %1052 = vrot.lane.b32.xlu0 %v901, 32
  %v1053 = vpop.permute.xlu0 %1052
  %1054 = vrot.lane.b32.xlu0 %v907, 32
  %v1055 = vpop.permute.xlu0 %1054
  %1056 = vrot.lane.b32.xlu0 %v913, 32
  %v1057 = vpop.permute.xlu0 %1056
  %1058 = vrot.lane.b32.xlu0 %v919, 32
  %v1059 = vpop.permute.xlu0 %1058
  %1060 = vrot.lane.b32.xlu0 %v925, 32
  %v1061 = vpop.permute.xlu0 %1060
  %1062 = vrot.lane.b32.xlu0 %v931, 32
  %v1063 = vpop.permute.xlu0 %1062
  %1072 = vrot.lane.b32.xlu0 %v889, 64
  %v1073 = vpop.permute.xlu0 %1072
  %1074 = vrot.lane.b32.xlu0 %v895, 64
  %v1075 = vpop.permute.xlu0 %1074
  %1076 = vrot.lane.b32.xlu0 %v901, 64
  %v1077 = vpop.permute.xlu0 %1076
  %1078 = vrot.lane.b32.xlu0 %v907, 64
  %v1079 = vpop.permute.xlu0 %1078
  %1080 = vrot.lane.b32.xlu0 %v913, 64
  %v1081 = vpop.permute.xlu0 %1080
  %1082 = vrot.lane.b32.xlu0 %v919, 64
  %v1083 = vpop.permute.xlu0 %1082
  %1084 = vrot.lane.b32.xlu0 %v925, 64
  %v1085 = vpop.permute.xlu0 %1084
  %1086 = vrot.lane.b32.xlu0 %v931, 64
  %v1087 = vpop.permute.xlu0 %1086
  %1096 = vrot.lane.b32.xlu0 %v889, 96
  %v1097 = vpop.permute.xlu0 %1096
  %1098 = vrot.lane.b32.xlu0 %v895, 96
  %v1099 = vpop.permute.xlu0 %1098
  %1100 = vrot.lane.b32.xlu0 %v901, 96
  %v1101 = vpop.permute.xlu0 %1100
  %1102 = vrot.lane.b32.xlu0 %v907, 96
  %v1103 = vpop.permute.xlu0 %1102
  %1104 = vrot.lane.b32.xlu0 %v913, 96
  %v1105 = vpop.permute.xlu0 %1104
  %1106 = vrot.lane.b32.xlu0 %v919, 96
  %v1107 = vpop.permute.xlu0 %1106
  %1108 = vrot.lane.b32.xlu0 %v925, 96
  %v1109 = vpop.permute.xlu0 %1108
  %1110 = vrot.lane.b32.xlu0 %v931, 96
  %v1111 = vpop.permute.xlu0 %1110
  %v1120 = vsel %vm317, %v889, %v1049
  %v1121 = vsel %vm317, %v895, %v1051
  %v1122 = vsel %vm317, %v901, %v1053
  %v1123 = vsel %vm317, %v907, %v1055
  %v1124 = vsel %vm317, %v913, %v1057
  %v1125 = vsel %vm317, %v919, %v1059
  %v1126 = vsel %vm317, %v925, %v1061
  %v1127 = vsel %vm317, %v931, %v1063
  %v1128 = vsel %vm320, %v1120, %v1073
  %v1129 = vsel %vm320, %v1121, %v1075
  %v1130 = vsel %vm320, %v1122, %v1077
  %v1131 = vsel %vm320, %v1123, %v1079
  %v1132 = vsel %vm320, %v1124, %v1081
  %v1133 = vsel %vm320, %v1125, %v1083
  %v1134 = vsel %vm320, %v1126, %v1085
  %v1135 = vsel %vm320, %v1127, %v1087
  %v1136 = vsel %vm323, %v1128, %v1097
  %v1137 = vsel %vm323, %v1129, %v1099
  %v1138 = vsel %vm323, %v1130, %v1101
  %v1139 = vsel %vm323, %v1131, %v1103
  %v1140 = vsel %vm323, %v1132, %v1105
  %v1141 = vsel %vm323, %v1133, %v1107
  %v1142 = vsel %vm323, %v1134, %v1109
  %v1143 = vsel %vm323, %v1135, %v1111
  %1152 = vrot.lane.b32.xlu0 %v891, 96
  %v1153 = vpop.permute.xlu0 %1152
  %1154 = vrot.lane.b32.xlu0 %v897, 96
  %v1155 = vpop.permute.xlu0 %1154
  %1156 = vrot.lane.b32.xlu0 %v903, 96
  %v1157 = vpop.permute.xlu0 %1156
  %1158 = vrot.lane.b32.xlu0 %v909, 96
  %v1159 = vpop.permute.xlu0 %1158
  %1160 = vrot.lane.b32.xlu0 %v915, 96
  %v1161 = vpop.permute.xlu0 %1160
  %1162 = vrot.lane.b32.xlu0 %v921, 96
  %v1163 = vpop.permute.xlu0 %1162
  %1164 = vrot.lane.b32.xlu0 %v927, 96
  %v1165 = vpop.permute.xlu0 %1164
  %1166 = vrot.lane.b32.xlu0 %v933, 96
  %v1167 = vpop.permute.xlu0 %1166
  %v1168 = vsel %vm323, %v1097, %v1153
  %v1169 = vsel %vm323, %v1099, %v1155
  %v1170 = vsel %vm323, %v1101, %v1157
  %v1171 = vsel %vm323, %v1103, %v1159
  %v1172 = vsel %vm323, %v1105, %v1161
  %v1173 = vsel %vm323, %v1107, %v1163
  %v1174 = vsel %vm323, %v1109, %v1165
  %v1175 = vsel %vm323, %v1111, %v1167
  %v1192 = vadd.f32 %v1136, %v1168
  %v1193 = vadd.f32 %v889, %v1153
  %v1194 = vadd.f32 %v1137, %v1169
  %v1195 = vadd.f32 %v895, %v1155
  %v1196 = vadd.f32 %v1138, %v1170
  %v1197 = vadd.f32 %v901, %v1157
  %v1198 = vadd.f32 %v1139, %v1171
  %v1199 = vadd.f32 %v907, %v1159
  %v1200 = vadd.f32 %v1140, %v1172
  %v1201 = vadd.f32 %v913, %v1161
  %v1202 = vadd.f32 %v1141, %v1173
  %v1203 = vadd.f32 %v919, %v1163
  %v1204 = vadd.f32 %v1142, %v1174
  %v1205 = vadd.f32 %v925, %v1165
  %v1206 = vadd.f32 %v1143, %v1175
  %v1207 = vadd.f32 %v931, %v1167
  %v1208 = vadd.f32 %v891, 1e-08
  %v1209 = vadd.f32 %v1002, 1e-08
  %v1210 = vadd.f32 %v897, 1e-08
  %v1211 = vadd.f32 %v1007, 1e-08
  %v1212 = vadd.f32 %v903, 1e-08
  %v1213 = vadd.f32 %v1012, 1e-08
  %v1214 = vadd.f32 %v909, 1e-08
  %v1215 = vadd.f32 %v1017, 1e-08
  %v1216 = vadd.f32 %v915, 1e-08
  %v1217 = vadd.f32 %v1022, 1e-08
  %v1218 = vadd.f32 %v921, 1e-08
  %v1219 = vadd.f32 %v1027, 1e-08
  %v1220 = vadd.f32 %v927, 1e-08
  %v1221 = vadd.f32 %v1032, 1e-08
  %v1222 = vadd.f32 %v933, 1e-08
  %v1223 = vadd.f32 %v1037, 1e-08
  %v1224 = vrsqrt.pop %v1208
  %v1225 = vrsqrt.pop %v1209
  %v1226 = vrsqrt.pop %v1210
  %v1227 = vrsqrt.pop %v1211
  %v1228 = vrsqrt.pop %v1212
  %v1229 = vrsqrt.pop %v1213
  %v1230 = vrsqrt.pop %v1214
  %v1231 = vrsqrt.pop %v1215
  %v1232 = vrsqrt.pop %v1216
  %v1233 = vrsqrt.pop %v1217
  %v1234 = vrsqrt.pop %v1218
  %v1235 = vrsqrt.pop %v1219
  %v1236 = vrsqrt.pop %v1220
  %v1237 = vrsqrt.pop %v1221
  %v1238 = vrsqrt.pop %v1222
  %v1239 = vrsqrt.pop %v1223
  %v1240 = vmul.f32 %v1208, %v1224
  %v1241 = vmul.f32 %v1209, %v1225
  %v1242 = vmul.f32 %v1210, %v1226
  %v1243 = vmul.f32 %v1211, %v1227
  %v1244 = vmul.f32 %v1212, %v1228
  %v1245 = vmul.f32 %v1213, %v1229
  %v1246 = vmul.f32 %v1214, %v1230
  %v1247 = vmul.f32 %v1215, %v1231
  %v1248 = vmul.f32 %v1216, %v1232
  %v1249 = vmul.f32 %v1217, %v1233
  %v1250 = vmul.f32 %v1218, %v1234
  %v1251 = vmul.f32 %v1219, %v1235
  %v1252 = vmul.f32 %v1220, %v1236
  %v1253 = vmul.f32 %v1221, %v1237
  %v1254 = vmul.f32 %v1222, %v1238
  %v1255 = vmul.f32 %v1223, %v1239
  %1272 = vrot.lane.b32.xlu0 %v1224, 64
  %v1273 = vpop.permute.xlu0 %1272
  %1274 = vrot.lane.b32.xlu0 %v1225, 64
  %v1275 = vpop.permute.xlu0 %1274
  %1276 = vrot.lane.b32.xlu0 %v1226, 64
  %v1277 = vpop.permute.xlu0 %1276
  %1278 = vrot.lane.b32.xlu0 %v1227, 64
  %v1279 = vpop.permute.xlu0 %1278
  %1280 = vrot.lane.b32.xlu0 %v1228, 64
  %v1281 = vpop.permute.xlu0 %1280
  %1282 = vrot.lane.b32.xlu0 %v1229, 64
  %v1283 = vpop.permute.xlu0 %1282
  %1284 = vrot.lane.b32.xlu0 %v1230, 64
  %v1285 = vpop.permute.xlu0 %1284
  %1286 = vrot.lane.b32.xlu0 %v1231, 64
  %v1287 = vpop.permute.xlu0 %1286
  %1288 = vrot.lane.b32.xlu0 %v1232, 64
  %v1289 = vpop.permute.xlu0 %1288
  %1290 = vrot.lane.b32.xlu0 %v1233, 64
  %v1291 = vpop.permute.xlu0 %1290
  %1292 = vrot.lane.b32.xlu0 %v1234, 64
  %v1293 = vpop.permute.xlu0 %1292
  %1294 = vrot.lane.b32.xlu0 %v1235, 64
  %v1295 = vpop.permute.xlu0 %1294
  %1296 = vrot.lane.b32.xlu0 %v1236, 64
  %v1297 = vpop.permute.xlu0 %1296
  %1298 = vrot.lane.b32.xlu0 %v1237, 64
  %v1299 = vpop.permute.xlu0 %1298
  %1300 = vrot.lane.b32.xlu0 %v1238, 64
  %v1301 = vpop.permute.xlu0 %1300
  %1302 = vrot.lane.b32.xlu0 %v1239, 64
  %v1303 = vpop.permute.xlu0 %1302
  %v1304 = vsel %vm320, %v1273, %v1275
  %v1305 = vsel %vm320, %v1277, %v1279
  %v1306 = vsel %vm320, %v1281, %v1283
  %v1307 = vsel %vm320, %v1285, %v1287
  %v1308 = vsel %vm320, %v1289, %v1291
  %v1309 = vsel %vm320, %v1293, %v1295
  %v1310 = vsel %vm320, %v1297, %v1299
  %v1311 = vsel %vm320, %v1301, %v1303
  %v1328 = vmul.f32 %v1192, %v1304
  %v1329 = vmul.f32 %v1193, %v1275
  %v1330 = vmul.f32 %v1194, %v1305
  %v1331 = vmul.f32 %v1195, %v1279
  %v1332 = vmul.f32 %v1196, %v1306
  %v1333 = vmul.f32 %v1197, %v1283
  %v1334 = vmul.f32 %v1198, %v1307
  %v1335 = vmul.f32 %v1199, %v1287
  %v1336 = vmul.f32 %v1200, %v1308
  %v1337 = vmul.f32 %v1201, %v1291
  %v1338 = vmul.f32 %v1202, %v1309
  %v1339 = vmul.f32 %v1203, %v1295
  %v1340 = vmul.f32 %v1204, %v1310
  %v1341 = vmul.f32 %v1205, %v1299
  %v1342 = vmul.f32 %v1206, %v1311
  %v1343 = vmul.f32 %v1207, %v1303
  %v1344 = vmul.f32 %v1328, 0.70710677
  %v1345 = vmul.f32 %v1329, 0.70710677
  %v1346 = vmul.f32 %v1330, 0.70710677
  %v1347 = vmul.f32 %v1331, 0.70710677
  %v1348 = vmul.f32 %v1332, 0.70710677
  %v1349 = vmul.f32 %v1333, 0.70710677
  %v1350 = vmul.f32 %v1334, 0.70710677
  %v1351 = vmul.f32 %v1335, 0.70710677
  %v1352 = vmul.f32 %v1336, 0.70710677
  %v1353 = vmul.f32 %v1337, 0.70710677
  %v1354 = vmul.f32 %v1338, 0.70710677
  %v1355 = vmul.f32 %v1339, 0.70710677
  %v1356 = vmul.f32 %v1340, 0.70710677
  %v1357 = vmul.f32 %v1341, 0.70710677
  %v1358 = vmul.f32 %v1342, 0.70710677
  %v1359 = vmul.f32 %v1343, 0.70710677
  %vm1360 = vcmp.lt.f32.partialorder %v1344, 0.0
  %vm1361 = vcmp.lt.f32.partialorder %v1345, 0.0
  %vm1362 = vcmp.lt.f32.partialorder %v1346, 0.0
  %vm1363 = vcmp.lt.f32.partialorder %v1347, 0.0
  %vm1364 = vcmp.lt.f32.partialorder %v1348, 0.0
  %vm1365 = vcmp.lt.f32.partialorder %v1349, 0.0
  %vm1366 = vcmp.lt.f32.partialorder %v1350, 0.0
  %vm1367 = vcmp.lt.f32.partialorder %v1351, 0.0
  %vm1368 = vcmp.lt.f32.partialorder %v1352, 0.0
  %vm1369 = vcmp.lt.f32.partialorder %v1353, 0.0
  %vm1370 = vcmp.lt.f32.partialorder %v1354, 0.0
  %vm1371 = vcmp.lt.f32.partialorder %v1355, 0.0
  %vm1372 = vcmp.lt.f32.partialorder %v1356, 0.0
  %vm1373 = vcmp.lt.f32.partialorder %v1357, 0.0
  %vm1374 = vcmp.lt.f32.partialorder %v1358, 0.0
  %vm1375 = vcmp.lt.f32.partialorder %v1359, 0.0
  %v1376 = vsel %vm1360, -1.0, 1.0
  %v1377 = vsel %vm1361, -1.0, 1.0
  %v1378 = vsel %vm1362, -1.0, 1.0
  %v1379 = vsel %vm1363, -1.0, 1.0
  %v1380 = vsel %vm1364, -1.0, 1.0
  %v1381 = vsel %vm1365, -1.0, 1.0
  %v1382 = vsel %vm1366, -1.0, 1.0
  %v1383 = vsel %vm1367, -1.0, 1.0
  %v1384 = vsel %vm1368, -1.0, 1.0
  %v1385 = vsel %vm1369, -1.0, 1.0
  %v1386 = vsel %vm1370, -1.0, 1.0
  %v1387 = vsel %vm1371, -1.0, 1.0
  %v1388 = vsel %vm1372, -1.0, 1.0
  %v1389 = vsel %vm1373, -1.0, 1.0
  %v1390 = vsel %vm1374, -1.0, 1.0
  %v1391 = vsel %vm1375, -1.0, 1.0
  %v1392 = vand.u32 2147483647, %v1344
  %v1393 = vand.u32 2147483647, %v1345
  %v1394 = vand.u32 2147483647, %v1346
  %v1395 = vand.u32 2147483647, %v1347
  %v1396 = vand.u32 2147483647, %v1348
  %v1397 = vand.u32 2147483647, %v1349
  %v1398 = vand.u32 2147483647, %v1350
  %v1399 = vand.u32 2147483647, %v1351
  %v1400 = vand.u32 2147483647, %v1352
  %v1401 = vand.u32 2147483647, %v1353
  %v1402 = vand.u32 2147483647, %v1354
  %v1403 = vand.u32 2147483647, %v1355
  %v1404 = vand.u32 2147483647, %v1356
  %v1405 = vand.u32 2147483647, %v1357
  %v1406 = vand.u32 2147483647, %v1358
  %v1407 = vand.u32 2147483647, %v1359
  %v1408 = vmul.f32 %v1392, 0.3275911
  %v1409 = vmul.f32 %v1393, 0.3275911
  %v1410 = vmul.f32 %v1394, 0.3275911
  %v1411 = vmul.f32 %v1395, 0.3275911
  %v1412 = vmul.f32 %v1396, 0.3275911
  %v1413 = vmul.f32 %v1397, 0.3275911
  %v1414 = vmul.f32 %v1398, 0.3275911
  %v1415 = vmul.f32 %v1399, 0.3275911
  %v1416 = vmul.f32 %v1400, 0.3275911
  %v1417 = vmul.f32 %v1401, 0.3275911
  %v1418 = vmul.f32 %v1402, 0.3275911
  %v1419 = vmul.f32 %v1403, 0.3275911
  %v1420 = vmul.f32 %v1404, 0.3275911
  %v1421 = vmul.f32 %v1405, 0.3275911
  %v1422 = vmul.f32 %v1406, 0.3275911
  %v1423 = vmul.f32 %v1407, 0.3275911
  %v1424 = vadd.f32 %v1408, 1.0
  %v1425 = vadd.f32 %v1409, 1.0
  %v1426 = vadd.f32 %v1410, 1.0
  %v1427 = vadd.f32 %v1411, 1.0
  %v1428 = vadd.f32 %v1412, 1.0
  %v1429 = vadd.f32 %v1413, 1.0
  %v1430 = vadd.f32 %v1414, 1.0
  %v1431 = vadd.f32 %v1415, 1.0
  %v1432 = vadd.f32 %v1416, 1.0
  %v1433 = vadd.f32 %v1417, 1.0
  %v1434 = vadd.f32 %v1418, 1.0
  %v1435 = vadd.f32 %v1419, 1.0
  %v1436 = vadd.f32 %v1420, 1.0
  %v1437 = vadd.f32 %v1421, 1.0
  %v1438 = vadd.f32 %v1422, 1.0
  %v1439 = vadd.f32 %v1423, 1.0
  %v1440 = vrcp.pop %v1424
  %v1441 = vrcp.pop %v1425
  %v1442 = vrcp.pop %v1426
  %v1443 = vrcp.pop %v1427
  %v1444 = vrcp.pop %v1428
  %v1445 = vrcp.pop %v1429
  %v1446 = vrcp.pop %v1430
  %v1447 = vrcp.pop %v1431
  %v1448 = vrcp.pop %v1432
  %v1449 = vrcp.pop %v1433
  %v1450 = vrcp.pop %v1434
  %v1451 = vrcp.pop %v1435
  %v1452 = vrcp.pop %v1436
  %v1453 = vrcp.pop %v1437
  %v1454 = vrcp.pop %v1438
  %v1455 = vrcp.pop %v1439
  %v1456 = vmul.f32 %v1440, 1.0614054
  %v1457 = vmul.f32 %v1441, 1.0614054
  %v1458 = vmul.f32 %v1442, 1.0614054
  %v1459 = vmul.f32 %v1443, 1.0614054
  %v1460 = vmul.f32 %v1444, 1.0614054
  %v1461 = vmul.f32 %v1445, 1.0614054
  %v1462 = vmul.f32 %v1446, 1.0614054
  %v1463 = vmul.f32 %v1447, 1.0614054
  %v1464 = vmul.f32 %v1448, 1.0614054
  %v1465 = vmul.f32 %v1449, 1.0614054
  %v1466 = vmul.f32 %v1450, 1.0614054
  %v1467 = vmul.f32 %v1451, 1.0614054
  %v1468 = vmul.f32 %v1452, 1.0614054
  %v1469 = vmul.f32 %v1453, 1.0614054
  %v1470 = vmul.f32 %v1454, 1.0614054
  %v1471 = vmul.f32 %v1455, 1.0614054
  %v1472 = vadd.f32 %v1456, -1.4531521
  %v1473 = vadd.f32 %v1457, -1.4531521
  %v1474 = vadd.f32 %v1458, -1.4531521
  %v1475 = vadd.f32 %v1459, -1.4531521
  %v1476 = vadd.f32 %v1460, -1.4531521
  %v1477 = vadd.f32 %v1461, -1.4531521
  %v1478 = vadd.f32 %v1462, -1.4531521
  %v1479 = vadd.f32 %v1463, -1.4531521
  %v1480 = vadd.f32 %v1464, -1.4531521
  %v1481 = vadd.f32 %v1465, -1.4531521
  %v1482 = vadd.f32 %v1466, -1.4531521
  %v1483 = vadd.f32 %v1467, -1.4531521
  %v1484 = vadd.f32 %v1468, -1.4531521
  %v1485 = vadd.f32 %v1469, -1.4531521
  %v1486 = vadd.f32 %v1470, -1.4531521
  %v1487 = vadd.f32 %v1471, -1.4531521
  %v1488 = vmul.f32 %v1472, %v1440
  %v1489 = vmul.f32 %v1473, %v1441
  %v1490 = vmul.f32 %v1474, %v1442
  %v1491 = vmul.f32 %v1475, %v1443
  %v1492 = vmul.f32 %v1476, %v1444
  %v1493 = vmul.f32 %v1477, %v1445
  %v1494 = vmul.f32 %v1478, %v1446
  %v1495 = vmul.f32 %v1479, %v1447
  %v1496 = vmul.f32 %v1480, %v1448
  %v1497 = vmul.f32 %v1481, %v1449
  %v1498 = vmul.f32 %v1482, %v1450
  %v1499 = vmul.f32 %v1483, %v1451
  %v1500 = vmul.f32 %v1484, %v1452
  %v1501 = vmul.f32 %v1485, %v1453
  %v1502 = vmul.f32 %v1486, %v1454
  %v1503 = vmul.f32 %v1487, %v1455
  %v1504 = vadd.f32 %v1488, 1.4214138
  %v1505 = vadd.f32 %v1489, 1.4214138
  %v1506 = vadd.f32 %v1490, 1.4214138
  %v1507 = vadd.f32 %v1491, 1.4214138
  %v1508 = vadd.f32 %v1492, 1.4214138
  %v1509 = vadd.f32 %v1493, 1.4214138
  %v1510 = vadd.f32 %v1494, 1.4214138
  %v1511 = vadd.f32 %v1495, 1.4214138
  %v1512 = vadd.f32 %v1496, 1.4214138
  %v1513 = vadd.f32 %v1497, 1.4214138
  %v1514 = vadd.f32 %v1498, 1.4214138
  %v1515 = vadd.f32 %v1499, 1.4214138
  %v1516 = vadd.f32 %v1500, 1.4214138
  %v1517 = vadd.f32 %v1501, 1.4214138
  %v1518 = vadd.f32 %v1502, 1.4214138
  %v1519 = vadd.f32 %v1503, 1.4214138
  %v1520 = vmul.f32 %v1504, %v1440
  %v1521 = vmul.f32 %v1505, %v1441
  %v1522 = vmul.f32 %v1506, %v1442
  %v1523 = vmul.f32 %v1507, %v1443
  %v1524 = vmul.f32 %v1508, %v1444
  %v1525 = vmul.f32 %v1509, %v1445
  %v1526 = vmul.f32 %v1510, %v1446
  %v1527 = vmul.f32 %v1511, %v1447
  %v1528 = vmul.f32 %v1512, %v1448
  %v1529 = vmul.f32 %v1513, %v1449
  %v1530 = vmul.f32 %v1514, %v1450
  %v1531 = vmul.f32 %v1515, %v1451
  %v1532 = vmul.f32 %v1516, %v1452
  %v1533 = vmul.f32 %v1517, %v1453
  %v1534 = vmul.f32 %v1518, %v1454
  %v1535 = vmul.f32 %v1519, %v1455
  %v1536 = vadd.f32 %v1520, -0.28449672
  %v1537 = vadd.f32 %v1521, -0.28449672
  %v1538 = vadd.f32 %v1522, -0.28449672
  %v1539 = vadd.f32 %v1523, -0.28449672
  %v1540 = vadd.f32 %v1524, -0.28449672
  %v1541 = vadd.f32 %v1525, -0.28449672
  %v1542 = vadd.f32 %v1526, -0.28449672
  %v1543 = vadd.f32 %v1527, -0.28449672
  %v1544 = vadd.f32 %v1528, -0.28449672
  %v1545 = vadd.f32 %v1529, -0.28449672
  %v1546 = vadd.f32 %v1530, -0.28449672
  %v1547 = vadd.f32 %v1531, -0.28449672
  %v1548 = vadd.f32 %v1532, -0.28449672
  %v1549 = vadd.f32 %v1533, -0.28449672
  %v1550 = vadd.f32 %v1534, -0.28449672
  %v1551 = vadd.f32 %v1535, -0.28449672
  %v1552 = vmul.f32 %v1536, %v1440
  %v1553 = vmul.f32 %v1537, %v1441
  %v1554 = vmul.f32 %v1538, %v1442
  %v1555 = vmul.f32 %v1539, %v1443
  %v1556 = vmul.f32 %v1540, %v1444
  %v1557 = vmul.f32 %v1541, %v1445
  %v1558 = vmul.f32 %v1542, %v1446
  %v1559 = vmul.f32 %v1543, %v1447
  %v1560 = vmul.f32 %v1544, %v1448
  %v1561 = vmul.f32 %v1545, %v1449
  %v1562 = vmul.f32 %v1546, %v1450
  %v1563 = vmul.f32 %v1547, %v1451
  %v1564 = vmul.f32 %v1548, %v1452
  %v1565 = vmul.f32 %v1549, %v1453
  %v1566 = vmul.f32 %v1550, %v1454
  %v1567 = vmul.f32 %v1551, %v1455
  %v1568 = vadd.f32 %v1552, 0.2548296
  %v1569 = vadd.f32 %v1553, 0.2548296
  %v1570 = vadd.f32 %v1554, 0.2548296
  %v1571 = vadd.f32 %v1555, 0.2548296
  %v1572 = vadd.f32 %v1556, 0.2548296
  %v1573 = vadd.f32 %v1557, 0.2548296
  %v1574 = vadd.f32 %v1558, 0.2548296
  %v1575 = vadd.f32 %v1559, 0.2548296
  %v1576 = vadd.f32 %v1560, 0.2548296
  %v1577 = vadd.f32 %v1561, 0.2548296
  %v1578 = vadd.f32 %v1562, 0.2548296
  %v1579 = vadd.f32 %v1563, 0.2548296
  %v1580 = vadd.f32 %v1564, 0.2548296
  %v1581 = vadd.f32 %v1565, 0.2548296
  %v1582 = vadd.f32 %v1566, 0.2548296
  %v1583 = vadd.f32 %v1567, 0.2548296
  %v1584 = vmul.f32 %v1568, %v1440
  %v1585 = vmul.f32 %v1569, %v1441
  %v1586 = vmul.f32 %v1570, %v1442
  %v1587 = vmul.f32 %v1571, %v1443
  %v1588 = vmul.f32 %v1572, %v1444
  %v1589 = vmul.f32 %v1573, %v1445
  %v1590 = vmul.f32 %v1574, %v1446
  %v1591 = vmul.f32 %v1575, %v1447
  %v1592 = vmul.f32 %v1576, %v1448
  %v1593 = vmul.f32 %v1577, %v1449
  %v1594 = vmul.f32 %v1578, %v1450
  %v1595 = vmul.f32 %v1579, %v1451
  %v1596 = vmul.f32 %v1580, %v1452
  %v1597 = vmul.f32 %v1581, %v1453
  %v1598 = vmul.f32 %v1582, %v1454
  %v1599 = vmul.f32 %v1583, %v1455
  %v1600 = vsub.f32 0.0, %v1392
  %v1601 = vsub.f32 0.0, %v1393
  %v1602 = vsub.f32 0.0, %v1394
  %v1603 = vsub.f32 0.0, %v1395
  %v1604 = vsub.f32 0.0, %v1396
  %v1605 = vsub.f32 0.0, %v1397
  %v1606 = vsub.f32 0.0, %v1398
  %v1607 = vsub.f32 0.0, %v1399
  %v1608 = vsub.f32 0.0, %v1400
  %v1609 = vsub.f32 0.0, %v1401
  %v1610 = vsub.f32 0.0, %v1402
  %v1611 = vsub.f32 0.0, %v1403
  %v1612 = vsub.f32 0.0, %v1404
  %v1613 = vsub.f32 0.0, %v1405
  %v1614 = vsub.f32 0.0, %v1406
  %v1615 = vsub.f32 0.0, %v1407
  %v1616 = vmul.f32 %v1600, %v1392
  %v1617 = vmul.f32 %v1601, %v1393
  %v1618 = vmul.f32 %v1602, %v1394
  %v1619 = vmul.f32 %v1603, %v1395
  %v1620 = vmul.f32 %v1604, %v1396
  %v1621 = vmul.f32 %v1605, %v1397
  %v1622 = vmul.f32 %v1606, %v1398
  %v1623 = vmul.f32 %v1607, %v1399
  %v1624 = vmul.f32 %v1608, %v1400
  %v1625 = vmul.f32 %v1609, %v1401
  %v1626 = vmul.f32 %v1610, %v1402
  %v1627 = vmul.f32 %v1611, %v1403
  %v1628 = vmul.f32 %v1612, %v1404
  %v1629 = vmul.f32 %v1613, %v1405
  %v1630 = vmul.f32 %v1614, %v1406
  %v1631 = vmul.f32 %v1615, %v1407
  %v1632 = vmul.f32 %v1616, 1.442695
  %v1633 = vpow.pop %v1632
  %v1634 = vmul.f32 %v1617, 1.442695
  %v1635 = vpow.pop %v1634
  %v1636 = vmul.f32 %v1618, 1.442695
  %v1637 = vpow.pop %v1636
  %v1638 = vmul.f32 %v1619, 1.442695
  %v1639 = vpow.pop %v1638
  %v1640 = vmul.f32 %v1620, 1.442695
  %v1641 = vpow.pop %v1640
  %v1642 = vmul.f32 %v1621, 1.442695
  %v1643 = vpow.pop %v1642
  %v1644 = vmul.f32 %v1622, 1.442695
  %v1645 = vpow.pop %v1644
  %v1646 = vmul.f32 %v1623, 1.442695
  %v1647 = vpow.pop %v1646
  %v1648 = vmul.f32 %v1624, 1.442695
  %v1649 = vpow.pop %v1648
  %v1650 = vmul.f32 %v1625, 1.442695
  %v1651 = vpow.pop %v1650
  %v1652 = vmul.f32 %v1626, 1.442695
  %v1653 = vpow.pop %v1652
  %v1654 = vmul.f32 %v1627, 1.442695
  %v1655 = vpow.pop %v1654
  %v1656 = vmul.f32 %v1628, 1.442695
  %v1657 = vpow.pop %v1656
  %v1658 = vmul.f32 %v1629, 1.442695
  %v1659 = vpow.pop %v1658
  %v1660 = vmul.f32 %v1630, 1.442695
  %v1661 = vpow.pop %v1660
  %v1662 = vmul.f32 %v1631, 1.442695
  %v1663 = vpow.pop %v1662
  %v1664 = vmul.f32 %v1584, %v1633
  %v1665 = vmul.f32 %v1585, %v1635
  %v1666 = vmul.f32 %v1586, %v1637
  %v1667 = vmul.f32 %v1587, %v1639
  %v1668 = vmul.f32 %v1588, %v1641
  %v1669 = vmul.f32 %v1589, %v1643
  %v1670 = vmul.f32 %v1590, %v1645
  %v1671 = vmul.f32 %v1591, %v1647
  %v1672 = vmul.f32 %v1592, %v1649
  %v1673 = vmul.f32 %v1593, %v1651
  %v1674 = vmul.f32 %v1594, %v1653
  %v1675 = vmul.f32 %v1595, %v1655
  %v1676 = vmul.f32 %v1596, %v1657
  %v1677 = vmul.f32 %v1597, %v1659
  %v1678 = vmul.f32 %v1598, %v1661
  %v1679 = vmul.f32 %v1599, %v1663
  %v1680 = vsub.f32 1.0, %v1664
  %v1681 = vsub.f32 1.0, %v1665
  %v1682 = vsub.f32 1.0, %v1666
  %v1683 = vsub.f32 1.0, %v1667
  %v1684 = vsub.f32 1.0, %v1668
  %v1685 = vsub.f32 1.0, %v1669
  %v1686 = vsub.f32 1.0, %v1670
  %v1687 = vsub.f32 1.0, %v1671
  %v1688 = vsub.f32 1.0, %v1672
  %v1689 = vsub.f32 1.0, %v1673
  %v1690 = vsub.f32 1.0, %v1674
  %v1691 = vsub.f32 1.0, %v1675
  %v1692 = vsub.f32 1.0, %v1676
  %v1693 = vsub.f32 1.0, %v1677
  %v1694 = vsub.f32 1.0, %v1678
  %v1695 = vsub.f32 1.0, %v1679
  %v1696 = vmul.f32 %v1376, %v1680
  %v1697 = vmul.f32 %v1377, %v1681
  %v1698 = vmul.f32 %v1378, %v1682
  %v1699 = vmul.f32 %v1379, %v1683
  %v1700 = vmul.f32 %v1380, %v1684
  %v1701 = vmul.f32 %v1381, %v1685
  %v1702 = vmul.f32 %v1382, %v1686
  %v1703 = vmul.f32 %v1383, %v1687
  %v1704 = vmul.f32 %v1384, %v1688
  %v1705 = vmul.f32 %v1385, %v1689
  %v1706 = vmul.f32 %v1386, %v1690
  %v1707 = vmul.f32 %v1387, %v1691
  %v1708 = vmul.f32 %v1388, %v1692
  %v1709 = vmul.f32 %v1389, %v1693
  %v1710 = vmul.f32 %v1390, %v1694
  %v1711 = vmul.f32 %v1391, %v1695
  %v1712 = vadd.f32 %v1696, 1.0
  %v1713 = vadd.f32 %v1697, 1.0
  %v1714 = vadd.f32 %v1698, 1.0
  %v1715 = vadd.f32 %v1699, 1.0
  %v1716 = vadd.f32 %v1700, 1.0
  %v1717 = vadd.f32 %v1701, 1.0
  %v1718 = vadd.f32 %v1702, 1.0
  %v1719 = vadd.f32 %v1703, 1.0
  %v1720 = vadd.f32 %v1704, 1.0
  %v1721 = vadd.f32 %v1705, 1.0
  %v1722 = vadd.f32 %v1706, 1.0
  %v1723 = vadd.f32 %v1707, 1.0
  %v1724 = vadd.f32 %v1708, 1.0
  %v1725 = vadd.f32 %v1709, 1.0
  %v1726 = vadd.f32 %v1710, 1.0
  %v1727 = vadd.f32 %v1711, 1.0
  %v1728 = vmul.f32 %v1712, 0.5
  %v1729 = vmul.f32 %v1713, 0.5
  %v1730 = vmul.f32 %v1714, 0.5
  %v1731 = vmul.f32 %v1715, 0.5
  %v1732 = vmul.f32 %v1716, 0.5
  %v1733 = vmul.f32 %v1717, 0.5
  %v1734 = vmul.f32 %v1718, 0.5
  %v1735 = vmul.f32 %v1719, 0.5
  %v1736 = vmul.f32 %v1720, 0.5
  %v1737 = vmul.f32 %v1721, 0.5
  %v1738 = vmul.f32 %v1722, 0.5
  %v1739 = vmul.f32 %v1723, 0.5
  %v1740 = vmul.f32 %v1724, 0.5
  %v1741 = vmul.f32 %v1725, 0.5
  %v1742 = vmul.f32 %v1726, 0.5
  %v1743 = vmul.f32 %v1727, 0.5
  %v1744 = vmul.f32 %v1192, %v1728
  %v1745 = vmul.f32 %v1193, %v1729
  %v1746 = vmul.f32 %v1194, %v1730
  %v1747 = vmul.f32 %v1195, %v1731
  %v1748 = vmul.f32 %v1196, %v1732
  %v1749 = vmul.f32 %v1197, %v1733
  %v1750 = vmul.f32 %v1198, %v1734
  %v1751 = vmul.f32 %v1199, %v1735
  %v1752 = vmul.f32 %v1200, %v1736
  %v1753 = vmul.f32 %v1201, %v1737
  %v1754 = vmul.f32 %v1202, %v1738
  %v1755 = vmul.f32 %v1203, %v1739
  %v1756 = vmul.f32 %v1204, %v1740
  %v1757 = vmul.f32 %v1205, %v1741
  %v1758 = vmul.f32 %v1206, %v1742
  %v1759 = vmul.f32 %v1207, %v1743
  %v1760 = vmul.f32 %v1328, -0.5
  %v1761 = vmul.f32 %v1329, -0.5
  %v1762 = vmul.f32 %v1330, -0.5
  %v1763 = vmul.f32 %v1331, -0.5
  %v1764 = vmul.f32 %v1332, -0.5
  %v1765 = vmul.f32 %v1333, -0.5
  %v1766 = vmul.f32 %v1334, -0.5
  %v1767 = vmul.f32 %v1335, -0.5
  %v1768 = vmul.f32 %v1336, -0.5
  %v1769 = vmul.f32 %v1337, -0.5
  %v1770 = vmul.f32 %v1338, -0.5
  %v1771 = vmul.f32 %v1339, -0.5
  %v1772 = vmul.f32 %v1340, -0.5
  %v1773 = vmul.f32 %v1341, -0.5
  %v1774 = vmul.f32 %v1342, -0.5
  %v1775 = vmul.f32 %v1343, -0.5
  %v1776 = vmul.f32 %v1760, %v1328
  %v1777 = vmul.f32 %v1761, %v1329
  %v1778 = vmul.f32 %v1762, %v1330
  %v1779 = vmul.f32 %v1763, %v1331
  %v1780 = vmul.f32 %v1764, %v1332
  %v1781 = vmul.f32 %v1765, %v1333
  %v1782 = vmul.f32 %v1766, %v1334
  %v1783 = vmul.f32 %v1767, %v1335
  %v1784 = vmul.f32 %v1768, %v1336
  %v1785 = vmul.f32 %v1769, %v1337
  %v1786 = vmul.f32 %v1770, %v1338
  %v1787 = vmul.f32 %v1771, %v1339
  %v1788 = vmul.f32 %v1772, %v1340
  %v1789 = vmul.f32 %v1773, %v1341
  %v1790 = vmul.f32 %v1774, %v1342
  %v1791 = vmul.f32 %v1775, %v1343
  %v1792 = vmul.f32 %v1776, 1.442695
  %v1793 = vpow.pop %v1792
  %v1794 = vmul.f32 %v1777, 1.442695
  %v1795 = vpow.pop %v1794
  %v1796 = vmul.f32 %v1778, 1.442695
  %v1797 = vpow.pop %v1796
  %v1798 = vmul.f32 %v1779, 1.442695
  %v1799 = vpow.pop %v1798
  %v1800 = vmul.f32 %v1780, 1.442695
  %v1801 = vpow.pop %v1800
  %v1802 = vmul.f32 %v1781, 1.442695
  %v1803 = vpow.pop %v1802
  %v1804 = vmul.f32 %v1782, 1.442695
  %v1805 = vpow.pop %v1804
  %v1806 = vmul.f32 %v1783, 1.442695
  %v1807 = vpow.pop %v1806
  %v1808 = vmul.f32 %v1784, 1.442695
  %v1809 = vpow.pop %v1808
  %v1810 = vmul.f32 %v1785, 1.442695
  %v1811 = vpow.pop %v1810
  %v1812 = vmul.f32 %v1786, 1.442695
  %v1813 = vpow.pop %v1812
  %v1814 = vmul.f32 %v1787, 1.442695
  %v1815 = vpow.pop %v1814
  %v1816 = vmul.f32 %v1788, 1.442695
  %v1817 = vpow.pop %v1816
  %v1818 = vmul.f32 %v1789, 1.442695
  %v1819 = vpow.pop %v1818
  %v1820 = vmul.f32 %v1790, 1.442695
  %v1821 = vpow.pop %v1820
  %v1822 = vmul.f32 %v1791, 1.442695
  %v1823 = vpow.pop %v1822
  %v1824 = vmul.f32 %v1793, 0.3989423
  %v1825 = vmul.f32 %v1795, 0.3989423
  %v1826 = vmul.f32 %v1797, 0.3989423
  %v1827 = vmul.f32 %v1799, 0.3989423
  %v1828 = vmul.f32 %v1801, 0.3989423
  %v1829 = vmul.f32 %v1803, 0.3989423
  %v1830 = vmul.f32 %v1805, 0.3989423
  %v1831 = vmul.f32 %v1807, 0.3989423
  %v1832 = vmul.f32 %v1809, 0.3989423
  %v1833 = vmul.f32 %v1811, 0.3989423
  %v1834 = vmul.f32 %v1813, 0.3989423
  %v1835 = vmul.f32 %v1815, 0.3989423
  %v1836 = vmul.f32 %v1817, 0.3989423
  %v1837 = vmul.f32 %v1819, 0.3989423
  %v1838 = vmul.f32 %v1821, 0.3989423
  %v1839 = vmul.f32 %v1823, 0.3989423
  %1856 = vrot.lane.b32.xlu0 %v1824, 64
  %v1857 = vpop.permute.xlu0 %1856
  %1858 = vrot.lane.b32.xlu0 %v1825, 64
  %v1859 = vpop.permute.xlu0 %1858
  %1860 = vrot.lane.b32.xlu0 %v1826, 64
  %v1861 = vpop.permute.xlu0 %1860
  %1862 = vrot.lane.b32.xlu0 %v1827, 64
  %v1863 = vpop.permute.xlu0 %1862
  %1864 = vrot.lane.b32.xlu0 %v1828, 64
  %v1865 = vpop.permute.xlu0 %1864
  %1866 = vrot.lane.b32.xlu0 %v1829, 64
  %v1867 = vpop.permute.xlu0 %1866
  %1868 = vrot.lane.b32.xlu0 %v1830, 64
  %v1869 = vpop.permute.xlu0 %1868
  %1870 = vrot.lane.b32.xlu0 %v1831, 64
  %v1871 = vpop.permute.xlu0 %1870
  %1872 = vrot.lane.b32.xlu0 %v1832, 64
  %v1873 = vpop.permute.xlu0 %1872
  %1874 = vrot.lane.b32.xlu0 %v1833, 64
  %v1875 = vpop.permute.xlu0 %1874
  %1876 = vrot.lane.b32.xlu0 %v1834, 64
  %v1877 = vpop.permute.xlu0 %1876
  %1878 = vrot.lane.b32.xlu0 %v1835, 64
  %v1879 = vpop.permute.xlu0 %1878
  %1880 = vrot.lane.b32.xlu0 %v1836, 64
  %v1881 = vpop.permute.xlu0 %1880
  %1882 = vrot.lane.b32.xlu0 %v1837, 64
  %v1883 = vpop.permute.xlu0 %1882
  %1884 = vrot.lane.b32.xlu0 %v1838, 64
  %v1885 = vpop.permute.xlu0 %1884
  %1886 = vrot.lane.b32.xlu0 %v1839, 64
  %v1887 = vpop.permute.xlu0 %1886
  %v1888 = vsel %vm320, %v1857, %v1859
  %v1889 = vsel %vm320, %v1861, %v1863
  %v1890 = vsel %vm320, %v1865, %v1867
  %v1891 = vsel %vm320, %v1869, %v1871
  %v1892 = vsel %vm320, %v1873, %v1875
  %v1893 = vsel %vm320, %v1877, %v1879
  %v1894 = vsel %vm320, %v1881, %v1883
  %v1895 = vsel %vm320, %v1885, %v1887
  %v1912 = vmul.f32 %v1240, %v1857
  %v1913 = vmul.f32 %v1241, %v1888
  %v1914 = vmul.f32 %v1242, %v1861
  %v1915 = vmul.f32 %v1243, %v1889
  %v1916 = vmul.f32 %v1244, %v1865
  %v1917 = vmul.f32 %v1245, %v1890
  %v1918 = vmul.f32 %v1246, %v1869
  %v1919 = vmul.f32 %v1247, %v1891
  %v1920 = vmul.f32 %v1248, %v1873
  %v1921 = vmul.f32 %v1249, %v1892
  %v1922 = vmul.f32 %v1250, %v1877
  %v1923 = vmul.f32 %v1251, %v1893
  %v1924 = vmul.f32 %v1252, %v1881
  %v1925 = vmul.f32 %v1253, %v1894
  %v1926 = vmul.f32 %v1254, %v1885
  %v1927 = vmul.f32 %v1255, %v1895
  %1944 = vrot.lane.b32.xlu0 %v1912, 64
  %v1945 = vpop.permute.xlu0 %1944
  %1946 = vrot.lane.b32.xlu0 %v1913, 64
  %v1947 = vpop.permute.xlu0 %1946
  %1948 = vrot.lane.b32.xlu0 %v1914, 64
  %v1949 = vpop.permute.xlu0 %1948
  %1950 = vrot.lane.b32.xlu0 %v1915, 64
  %v1951 = vpop.permute.xlu0 %1950
  %1952 = vrot.lane.b32.xlu0 %v1916, 64
  %v1953 = vpop.permute.xlu0 %1952
  %1954 = vrot.lane.b32.xlu0 %v1917, 64
  %v1955 = vpop.permute.xlu0 %1954
  %1956 = vrot.lane.b32.xlu0 %v1918, 64
  %v1957 = vpop.permute.xlu0 %1956
  %1958 = vrot.lane.b32.xlu0 %v1919, 64
  %v1959 = vpop.permute.xlu0 %1958
  %1960 = vrot.lane.b32.xlu0 %v1920, 64
  %v1961 = vpop.permute.xlu0 %1960
  %1962 = vrot.lane.b32.xlu0 %v1921, 64
  %v1963 = vpop.permute.xlu0 %1962
  %1964 = vrot.lane.b32.xlu0 %v1922, 64
  %v1965 = vpop.permute.xlu0 %1964
  %1966 = vrot.lane.b32.xlu0 %v1923, 64
  %v1967 = vpop.permute.xlu0 %1966
  %1968 = vrot.lane.b32.xlu0 %v1924, 64
  %v1969 = vpop.permute.xlu0 %1968
  %1970 = vrot.lane.b32.xlu0 %v1925, 64
  %v1971 = vpop.permute.xlu0 %1970
  %1972 = vrot.lane.b32.xlu0 %v1926, 64
  %v1973 = vpop.permute.xlu0 %1972
  %1974 = vrot.lane.b32.xlu0 %v1927, 64
  %v1975 = vpop.permute.xlu0 %1974
  %v1976 = vsel %vm320, %v1945, %v1947
  %v1977 = vsel %vm320, %v1949, %v1951
  %v1978 = vsel %vm320, %v1953, %v1955
  %v1979 = vsel %vm320, %v1957, %v1959
  %v1980 = vsel %vm320, %v1961, %v1963
  %v1981 = vsel %vm320, %v1965, %v1967
  %v1982 = vsel %vm320, %v1969, %v1971
  %v1983 = vsel %vm320, %v1973, %v1975
  %v2000 = vadd.f32 %v1744, %v1976
  %v2001 = vadd.f32 %v1745, %v1947
  %v2002 = vadd.f32 %v1746, %v1977
  %v2003 = vadd.f32 %v1747, %v1951
  %v2004 = vadd.f32 %v1748, %v1978
  %v2005 = vadd.f32 %v1749, %v1955
  %v2006 = vadd.f32 %v1750, %v1979
  %v2007 = vadd.f32 %v1751, %v1959
  %v2008 = vadd.f32 %v1752, %v1980
  %v2009 = vadd.f32 %v1753, %v1963
  %v2010 = vadd.f32 %v1754, %v1981
  %v2011 = vadd.f32 %v1755, %v1967
  %v2012 = vadd.f32 %v1756, %v1982
  %v2013 = vadd.f32 %v1757, %v1971
  %v2014 = vadd.f32 %v1758, %v1983
  %v2015 = vadd.f32 %v1759, %v1975
  %v2016 = vmul.f32 %v85, %v85
  %v2017 = vmul.f32 %v86, %v86
  %v2018 = vmul.f32 %v87, %v87
  %v2019 = vmul.f32 %v88, %v88
  %v2020 = vmul.f32 %v89, %v89
  %v2021 = vmul.f32 %v90, %v90
  %v2022 = vmul.f32 %v91, %v91
  %v2023 = vmul.f32 %v92, %v92
  %2024 = vrot.lane.b32.xlu0 %v85, 16
  %v2025 = vpop.permute.xlu0 %2024
  %2026 = vrot.lane.b32.xlu0 %v86, 16
  %v2027 = vpop.permute.xlu0 %2026
  %2028 = vrot.lane.b32.xlu0 %v87, 16
  %v2029 = vpop.permute.xlu0 %2028
  %2030 = vrot.lane.b32.xlu0 %v88, 16
  %v2031 = vpop.permute.xlu0 %2030
  %2032 = vrot.lane.b32.xlu0 %v89, 16
  %v2033 = vpop.permute.xlu0 %2032
  %2034 = vrot.lane.b32.xlu0 %v90, 16
  %v2035 = vpop.permute.xlu0 %2034
  %2036 = vrot.lane.b32.xlu0 %v91, 16
  %v2037 = vpop.permute.xlu0 %2036
  %2038 = vrot.lane.b32.xlu0 %v92, 16
  %v2039 = vpop.permute.xlu0 %2038
  %2056 = vrot.lane.b32.xlu0 %v69, 32
  %v2057 = vpop.permute.xlu0 %2056
  %2058 = vrot.lane.b32.xlu0 %v70, 32
  %v2059 = vpop.permute.xlu0 %2058
  %2060 = vrot.lane.b32.xlu0 %v71, 32
  %v2061 = vpop.permute.xlu0 %2060
  %2062 = vrot.lane.b32.xlu0 %v72, 32
  %v2063 = vpop.permute.xlu0 %2062
  %2064 = vrot.lane.b32.xlu0 %v73, 32
  %v2065 = vpop.permute.xlu0 %2064
  %2066 = vrot.lane.b32.xlu0 %v74, 32
  %v2067 = vpop.permute.xlu0 %2066
  %2068 = vrot.lane.b32.xlu0 %v75, 32
  %v2069 = vpop.permute.xlu0 %2068
  %2070 = vrot.lane.b32.xlu0 %v76, 32
  %v2071 = vpop.permute.xlu0 %2070
  %v2080 = vsel %vm111, %v2016, %v2025
  %v2081 = vsel %vm111, %v2017, %v2027
  %v2082 = vsel %vm111, %v2018, %v2029
  %v2083 = vsel %vm111, %v2019, %v2031
  %v2084 = vsel %vm111, %v2020, %v2033
  %v2085 = vsel %vm111, %v2021, %v2035
  %v2086 = vsel %vm111, %v2022, %v2037
  %v2087 = vsel %vm111, %v2023, %v2039
  %v2088 = vsel %vm317, %v2080, %v2057
  %v2089 = vsel %vm317, %v2081, %v2059
  %v2090 = vsel %vm317, %v2082, %v2061
  %v2091 = vsel %vm317, %v2083, %v2063
  %v2092 = vsel %vm317, %v2084, %v2065
  %v2093 = vsel %vm317, %v2085, %v2067
  %v2094 = vsel %vm317, %v2086, %v2069
  %v2095 = vsel %vm317, %v2087, %v2071
  %v2096 = vmul.f32 %v48, -2.0
  %v2097 = vmul.f32 %v49, -2.0
  %v2098 = vmul.f32 %v2096, %v96
  %v2099 = vmul.f32 %v2097, %v98
  %v2100 = vmul.f32 %v48, %v48
  %v2101 = vmul.f32 %v49, %v49
  %v2102 = vmul.f32 %v2100, %v96
  %v2103 = vmul.f32 %v2101, %v98
  %vm2104 = vcmask 392192
  %v2106 = vsel %vm2104, %v2088, 0
  %v2109 = vsel %vm2104, %v2089, 0
  %v2112 = vsel %vm2104, %v2090, 0
  %v2115 = vsel %vm2104, %v2091, 0
  %v2118 = vsel %vm2104, %v2092, 0
  %v2121 = vsel %vm2104, %v2093, 0
  %v2124 = vsel %vm2104, %v2094, 0
  %v2127 = vsel %vm2104, %v2095, 0
  %2129 = vmatprep.subr.mxu0 0.0
  %2130 = vmatpush1.msra.mxu0 %v96
  %2131 = vmatprep.subr.mxu0 0.0
  %2132 = vmatpush1.msra.mxu0 %v98
  %2133 = vmatprep.subr.mxu0 0.0
  %2134 = vmatpush1.msra.mxu0 %v2098
  %2135 = vmatprep.subr.mxu0 0.0
  %2136 = vmatpush1.msra.mxu0 %v2099
  %2137 = vmatprep.subr.mxu0 0.0
  %2138 = vmatpush1.msra.mxu0 %v2102
  %2139 = vmatprep.subr.mxu0 0.0
  %2140 = vmatpush1.msra.mxu0 %v2103
  %2141 = vmatprep.subr.mxu0 0.0
  %2142 = vmatpush1.msra.mxu0 0.0
  %2143 = vmatprep.subr.mxu0 0.0
  %2144 = vmatpush1.msra.mxu0 0.0
  %2145 = vmatprep.subr.mxu0 0.0
  %2146 = vmatpush1.msra.mxu0 0.0
  %2147 = vmatprep.subr.mxu0 0.0
  %2148 = vmatpush1.msra.mxu0 0.0
  %2149 = vmatprep.subr.mxu0 0.0
  %2150 = vmatpush1.msra.mxu0 0.0
  %2151 = vmatprep.subr.mxu0 0.0
  %2152 = vmatpush1.msra.mxu0 0.0
  %2153 = vmatprep.subr.mxu0 0.0
  %2154 = vmatpush1.msra.mxu0 0.0
  %2155 = vmatprep.subr.mxu0 0.0
  %2156 = vmatpush1.msra.mxu0 0.0
  %2157 = vmatprep.subr.mxu0 0.0
  %2158 = vmatpush1.msra.mxu0 0.0
  %2159 = vmatprep.subr.mxu0 0.0
  %2160 = vmatpush1.msra.mxu0 0.0
  %2161 = vmatprep.subr.mxu0 0.0
  %2162 = vmatpush1.msra.mxu0 0.0
  %2163 = vmatprep.subr.mxu0 0.0
  %2164 = vmatpush1.msra.mxu0 0.0
  %2165 = vmatprep.subr.mxu0 0.0
  %2166 = vmatpush1.msra.mxu0 0.0
  %2167 = vmatprep.subr.mxu0 0.0
  %2168 = vmatpush1.msra.mxu0 0.0
  %2169 = vmatprep.subr.mxu0 0.0
  %2170 = vmatpush1.msra.mxu0 0.0
  %2171 = vmatprep.subr.mxu0 0.0
  %2172 = vmatpush1.msra.mxu0 0.0
  %2173 = vmatprep.subr.mxu0 0.0
  %2174 = vmatpush1.msra.mxu0 0.0
  %2175 = vmatprep.subr.mxu0 0.0
  %2176 = vmatpush1.msra.mxu0 0.0
  %2177 = vmatprep.subr.mxu0 0.0
  %2178 = vmatpush1.msra.mxu0 0.0
  %2179 = vmatprep.subr.mxu0 0.0
  %2180 = vmatpush1.msra.mxu0 0.0
  %2181 = vmatprep.subr.mxu0 0.0
  %2182 = vmatpush1.msra.mxu0 0.0
  %2183 = vmatprep.subr.mxu0 0.0
  %2184 = vmatpush1.msra.mxu0 0.0
  %2185 = vmatprep.subr.mxu0 0.0
  %2186 = vmatpush1.msra.mxu0 0.0
  %2187 = vmatprep.subr.mxu0 0.0
  %2188 = vmatpush1.msra.mxu0 0.0
  %2189 = vmatprep.subr.mxu0 0.0
  %2190 = vmatpush1.msra.mxu0 0.0
  %2191 = vmatprep.subr.mxu0 0.0
  %2192 = vmatpush1.msra.mxu0 0.0
  %2193 = vmatprep.mubr.f32.mxu0 0.0
  %2194 = vmatmul.mubr.f32.gmra.mrb[0].mxu0 %v2106
  %v2195 = vpop.f32.mrb[0].mxu0
  %v2196 = vadd.f32 0.0, %v2195
  %v2197 = vpop.f32.mrb[0].mxu0
  %2198 = vmatprep.mubr.f32.mxu0 0.0
  %2199 = vmatmul.mubr.f32.gmra.mrb[0].mxu0 %v2109
  %v2200 = vpop.f32.mrb[0].mxu0
  %v2201 = vadd.f32 0.0, %v2200
  %v2202 = vpop.f32.mrb[0].mxu0
  %2203 = vmatprep.mubr.f32.mxu0 0.0
  %2204 = vmatmul.mubr.f32.gmra.mrb[0].mxu0 %v2112
  %v2205 = vpop.f32.mrb[0].mxu0
  %v2206 = vadd.f32 0.0, %v2205
  %v2207 = vpop.f32.mrb[0].mxu0
  %2208 = vmatprep.mubr.f32.mxu0 0.0
  %2209 = vmatmul.mubr.f32.gmra.mrb[0].mxu0 %v2115
  %v2210 = vpop.f32.mrb[0].mxu0
  %v2211 = vadd.f32 0.0, %v2210
  %v2212 = vpop.f32.mrb[0].mxu0
  %2213 = vmatprep.mubr.f32.mxu0 0.0
  %2214 = vmatmul.mubr.f32.gmra.mrb[0].mxu0 %v2118
  %v2215 = vpop.f32.mrb[0].mxu0
  %v2216 = vadd.f32 0.0, %v2215
  %v2217 = vpop.f32.mrb[0].mxu0
  %2218 = vmatprep.mubr.f32.mxu0 0.0
  %2219 = vmatmul.mubr.f32.gmra.mrb[0].mxu0 %v2121
  %v2220 = vpop.f32.mrb[0].mxu0
  %v2221 = vadd.f32 0.0, %v2220
  %v2222 = vpop.f32.mrb[0].mxu0
  %2223 = vmatprep.mubr.f32.mxu0 0.0
  %2224 = vmatmul.mubr.f32.gmra.mrb[0].mxu0 %v2124
  %v2225 = vpop.f32.mrb[0].mxu0
  %v2226 = vadd.f32 0.0, %v2225
  %v2227 = vpop.f32.mrb[0].mxu0
  %2228 = vmatprep.mubr.f32.mxu0 0.0
  %2229 = vmatmul.mubr.f32.gmra.mrb[0].mxu0 %v2127
  %v2230 = vpop.f32.mrb[0].mxu0
  %v2231 = vadd.f32 0.0, %v2230
  %v2232 = vpop.f32.mrb[0].mxu0
  %2233 = vdwg.mxu0
  %vm2234 = vcmask 39936
  %v2235 = vsel %vm2234, %v50, 0.0
  %v2236 = vsel %vm2234, %v51, 0.0
  %v2237 = vadd.f32 %v2235, %v2236
  %v2238 = vrot.slane %v2237, 4
  %v2239 = vadd.f32 %v2237, %v2238
  %v2240 = vrot.slane %v2239, 2
  %v2241 = vadd.f32 %v2239, %v2240
  %v2242 = vrot.slane %v2241, 1
  %v2243 = vadd.f32 %v2241, %v2242
  %v2244 = vadd.f32 %v2243, 29.406033
  %v2245 = vmul.f32 %v2244, -0.5
  %v2246 = vadd.f32 %v52, %v2245
  %v2247 = vmul.f32 %v2196, 0.5
  %v2248 = vmul.f32 %v2201, 0.5
  %v2249 = vmul.f32 %v2206, 0.5
  %v2250 = vmul.f32 %v2211, 0.5
  %v2251 = vmul.f32 %v2216, 0.5
  %v2252 = vmul.f32 %v2221, 0.5
  %v2253 = vmul.f32 %v2226, 0.5
  %v2254 = vmul.f32 %v2231, 0.5
  %v2256 = vlaneseq
  %v2257 = vshrl.u32 %v2256, 7
  %v2258 = vsub.s32 0, %v2257
  %v2259 = vrot.slane %v2246, %v2258
  %v2261 = vsub.f32 %v2259, %v2247
  %v2262 = vsub.f32 %v2259, %v2248
  %v2263 = vsub.f32 %v2259, %v2249
  %v2264 = vsub.f32 %v2259, %v2250
  %v2265 = vsub.f32 %v2259, %v2251
  %v2266 = vsub.f32 %v2259, %v2252
  %v2267 = vsub.f32 %v2259, %v2253
  %v2268 = vsub.f32 %v2259, %v2254
  %v2269 = vsel %vm2234, %v2261, -inf
  %2270 = vmax.xlane.f32.xlu0 %v2269
  %v2271 = vpop.xlane.xlu0 %2270
  %v2272 = vsel %vm2234, %v2262, -inf
  %2273 = vmax.xlane.f32.xlu0 %v2272
  %v2274 = vpop.xlane.xlu0 %2273
  %v2275 = vsel %vm2234, %v2263, -inf
  %2276 = vmax.xlane.f32.xlu0 %v2275
  %v2277 = vpop.xlane.xlu0 %2276
  %v2278 = vsel %vm2234, %v2264, -inf
  %2279 = vmax.xlane.f32.xlu0 %v2278
  %v2280 = vpop.xlane.xlu0 %2279
  %v2281 = vsel %vm2234, %v2265, -inf
  %2282 = vmax.xlane.f32.xlu0 %v2281
  %v2283 = vpop.xlane.xlu0 %2282
  %v2284 = vsel %vm2234, %v2266, -inf
  %2285 = vmax.xlane.f32.xlu0 %v2284
  %v2286 = vpop.xlane.xlu0 %2285
  %v2287 = vsel %vm2234, %v2267, -inf
  %2288 = vmax.xlane.f32.xlu0 %v2287
  %v2289 = vpop.xlane.xlu0 %2288
  %v2290 = vsel %vm2234, %v2268, -inf
  %2291 = vmax.xlane.f32.xlu0 %v2290
  %v2292 = vpop.xlane.xlu0 %2291
  %v2293 = vsub.f32 %v2261, %v2271
  %v2294 = vsub.f32 %v2262, %v2274
  %v2295 = vsub.f32 %v2263, %v2277
  %v2296 = vsub.f32 %v2264, %v2280
  %v2297 = vsub.f32 %v2265, %v2283
  %v2298 = vsub.f32 %v2266, %v2286
  %v2299 = vsub.f32 %v2267, %v2289
  %v2300 = vsub.f32 %v2268, %v2292
  %v2301 = vmul.f32 %v2293, 1.442695
  %v2302 = vpow.pop %v2301
  %v2303 = vmul.f32 %v2294, 1.442695
  %v2304 = vpow.pop %v2303
  %v2305 = vmul.f32 %v2295, 1.442695
  %v2306 = vpow.pop %v2305
  %v2307 = vmul.f32 %v2296, 1.442695
  %v2308 = vpow.pop %v2307
  %v2309 = vmul.f32 %v2297, 1.442695
  %v2310 = vpow.pop %v2309
  %v2311 = vmul.f32 %v2298, 1.442695
  %v2312 = vpow.pop %v2311
  %v2313 = vmul.f32 %v2299, 1.442695
  %v2314 = vpow.pop %v2313
  %v2315 = vmul.f32 %v2300, 1.442695
  %v2316 = vpow.pop %v2315
  %v2317 = vsel %vm2234, %v2302, 0.0
  %2318 = vadd.xlane.f32.xlu0 %v2317
  %v2319 = vpop.xlane.xlu0 %2318
  %v2320 = vsel %vm2234, %v2304, 0.0
  %2321 = vadd.xlane.f32.xlu0 %v2320
  %v2322 = vpop.xlane.xlu0 %2321
  %v2323 = vsel %vm2234, %v2306, 0.0
  %2324 = vadd.xlane.f32.xlu0 %v2323
  %v2325 = vpop.xlane.xlu0 %2324
  %v2326 = vsel %vm2234, %v2308, 0.0
  %2327 = vadd.xlane.f32.xlu0 %v2326
  %v2328 = vpop.xlane.xlu0 %2327
  %v2329 = vsel %vm2234, %v2310, 0.0
  %2330 = vadd.xlane.f32.xlu0 %v2329
  %v2331 = vpop.xlane.xlu0 %2330
  %v2332 = vsel %vm2234, %v2312, 0.0
  %2333 = vadd.xlane.f32.xlu0 %v2332
  %v2334 = vpop.xlane.xlu0 %2333
  %v2335 = vsel %vm2234, %v2314, 0.0
  %2336 = vadd.xlane.f32.xlu0 %v2335
  %v2337 = vpop.xlane.xlu0 %2336
  %v2338 = vsel %vm2234, %v2316, 0.0
  %2339 = vadd.xlane.f32.xlu0 %v2338
  %v2340 = vpop.xlane.xlu0 %2339
  %v2341 = vrcp.pop %v2319
  %v2342 = vrcp.pop %v2322
  %v2343 = vrcp.pop %v2325
  %v2344 = vrcp.pop %v2328
  %v2345 = vrcp.pop %v2331
  %v2346 = vrcp.pop %v2334
  %v2347 = vrcp.pop %v2337
  %v2348 = vrcp.pop %v2340
  %v2349 = vmul.f32 %v2302, %v2341
  %v2350 = vmul.f32 %v2304, %v2342
  %v2351 = vmul.f32 %v2306, %v2343
  %v2352 = vmul.f32 %v2308, %v2344
  %v2353 = vmul.f32 %v2310, %v2345
  %v2354 = vmul.f32 %v2312, %v2346
  %v2355 = vmul.f32 %v2314, %v2347
  %v2356 = vmul.f32 %v2316, %v2348
  %2358 = vset.pattern.permute.xlu0 0
  %2359 = vperm.xlu0 %2358, %v2349
  %v2360 = vpop.permute.xlu0 %2359
  %2363 = vset.pattern.permute.xlu0 0
  %2364 = vperm.xlu0 %2363, %v2350
  %v2365 = vpop.permute.xlu0 %2364
  %2368 = vset.pattern.permute.xlu0 0
  %2369 = vperm.xlu0 %2368, %v2351
  %v2370 = vpop.permute.xlu0 %2369
  %2373 = vset.pattern.permute.xlu0 0
  %2374 = vperm.xlu0 %2373, %v2352
  %v2375 = vpop.permute.xlu0 %2374
  %2378 = vset.pattern.permute.xlu0 0
  %2379 = vperm.xlu0 %2378, %v2353
  %v2380 = vpop.permute.xlu0 %2379
  %2383 = vset.pattern.permute.xlu0 0
  %2384 = vperm.xlu0 %2383, %v2354
  %v2385 = vpop.permute.xlu0 %2384
  %2388 = vset.pattern.permute.xlu0 0
  %2389 = vperm.xlu0 %2388, %v2355
  %v2390 = vpop.permute.xlu0 %2389
  %2393 = vset.pattern.permute.xlu0 0
  %2394 = vperm.xlu0 %2393, %v2356
  %v2395 = vpop.permute.xlu0 %2394
  %v2397 = vmul.f32 %v2360, %v2000
  %v2398 = vmul.f32 %v2365, %v2002
  %v2399 = vmul.f32 %v2370, %v2004
  %v2400 = vmul.f32 %v2375, %v2006
  %v2401 = vmul.f32 %v2380, %v2008
  %v2402 = vmul.f32 %v2385, %v2010
  %v2403 = vmul.f32 %v2390, %v2012
  %v2404 = vmul.f32 %v2395, %v2014
  %2405 = vset.pattern.permute.xlu0 1
  %2406 = vperm.xlu0 %2405, %v2349
  %v2407 = vpop.permute.xlu0 %2406
  %2409 = vset.pattern.permute.xlu0 1
  %2410 = vperm.xlu0 %2409, %v2350
  %v2411 = vpop.permute.xlu0 %2410
  %2413 = vset.pattern.permute.xlu0 1
  %2414 = vperm.xlu0 %2413, %v2351
  %v2415 = vpop.permute.xlu0 %2414
  %2417 = vset.pattern.permute.xlu0 1
  %2418 = vperm.xlu0 %2417, %v2352
  %v2419 = vpop.permute.xlu0 %2418
  %2421 = vset.pattern.permute.xlu0 1
  %2422 = vperm.xlu0 %2421, %v2353
  %v2423 = vpop.permute.xlu0 %2422
  %2425 = vset.pattern.permute.xlu0 1
  %2426 = vperm.xlu0 %2425, %v2354
  %v2427 = vpop.permute.xlu0 %2426
  %2429 = vset.pattern.permute.xlu0 1
  %2430 = vperm.xlu0 %2429, %v2355
  %v2431 = vpop.permute.xlu0 %2430
  %2433 = vset.pattern.permute.xlu0 1
  %2434 = vperm.xlu0 %2433, %v2356
  %v2435 = vpop.permute.xlu0 %2434
  %v2437 = vmul.f32 %v2407, %v2000
  %v2438 = vmul.f32 %v2411, %v2002
  %v2439 = vmul.f32 %v2415, %v2004
  %v2440 = vmul.f32 %v2419, %v2006
  %v2441 = vmul.f32 %v2423, %v2008
  %v2442 = vmul.f32 %v2427, %v2010
  %v2443 = vmul.f32 %v2431, %v2012
  %v2444 = vmul.f32 %v2435, %v2014
  %2453 = vrot.lane.b32.xlu0 %v2437, 96
  %v2454 = vpop.permute.xlu0 %2453
  %2455 = vrot.lane.b32.xlu0 %v2438, 96
  %v2456 = vpop.permute.xlu0 %2455
  %2457 = vrot.lane.b32.xlu0 %v2439, 96
  %v2458 = vpop.permute.xlu0 %2457
  %2459 = vrot.lane.b32.xlu0 %v2440, 96
  %v2460 = vpop.permute.xlu0 %2459
  %2461 = vrot.lane.b32.xlu0 %v2441, 96
  %v2462 = vpop.permute.xlu0 %2461
  %2463 = vrot.lane.b32.xlu0 %v2442, 96
  %v2464 = vpop.permute.xlu0 %2463
  %2465 = vrot.lane.b32.xlu0 %v2443, 96
  %v2466 = vpop.permute.xlu0 %2465
  %2467 = vrot.lane.b32.xlu0 %v2444, 96
  %v2468 = vpop.permute.xlu0 %2467
  %v2477 = vadd.f32 %v2397, %v2454
  %v2478 = vadd.f32 %v2398, %v2456
  %v2479 = vadd.f32 %v2399, %v2458
  %v2480 = vadd.f32 %v2400, %v2460
  %v2481 = vadd.f32 %v2401, %v2462
  %v2482 = vadd.f32 %v2402, %v2464
  %v2483 = vadd.f32 %v2403, %v2466
  %v2484 = vadd.f32 %v2404, %v2468
  %2485 = vset.pattern.permute.xlu0 2
  %2486 = vperm.xlu0 %2485, %v2349
  %v2487 = vpop.permute.xlu0 %2486
  %2489 = vset.pattern.permute.xlu0 2
  %2490 = vperm.xlu0 %2489, %v2350
  %v2491 = vpop.permute.xlu0 %2490
  %2493 = vset.pattern.permute.xlu0 2
  %2494 = vperm.xlu0 %2493, %v2351
  %v2495 = vpop.permute.xlu0 %2494
  %2497 = vset.pattern.permute.xlu0 2
  %2498 = vperm.xlu0 %2497, %v2352
  %v2499 = vpop.permute.xlu0 %2498
  %2501 = vset.pattern.permute.xlu0 2
  %2502 = vperm.xlu0 %2501, %v2353
  %v2503 = vpop.permute.xlu0 %2502
  %2505 = vset.pattern.permute.xlu0 2
  %2506 = vperm.xlu0 %2505, %v2354
  %v2507 = vpop.permute.xlu0 %2506
  %2509 = vset.pattern.permute.xlu0 2
  %2510 = vperm.xlu0 %2509, %v2355
  %v2511 = vpop.permute.xlu0 %2510
  %2513 = vset.pattern.permute.xlu0 2
  %2514 = vperm.xlu0 %2513, %v2356
  %v2515 = vpop.permute.xlu0 %2514
  %v2517 = vmul.f32 %v2487, %v2000
  %v2518 = vmul.f32 %v2491, %v2002
  %v2519 = vmul.f32 %v2495, %v2004
  %v2520 = vmul.f32 %v2499, %v2006
  %v2521 = vmul.f32 %v2503, %v2008
  %v2522 = vmul.f32 %v2507, %v2010
  %v2523 = vmul.f32 %v2511, %v2012
  %v2524 = vmul.f32 %v2515, %v2014
  %2533 = vrot.lane.b32.xlu0 %v2517, 64
  %v2534 = vpop.permute.xlu0 %2533
  %2535 = vrot.lane.b32.xlu0 %v2518, 64
  %v2536 = vpop.permute.xlu0 %2535
  %2537 = vrot.lane.b32.xlu0 %v2519, 64
  %v2538 = vpop.permute.xlu0 %2537
  %2539 = vrot.lane.b32.xlu0 %v2520, 64
  %v2540 = vpop.permute.xlu0 %2539
  %2541 = vrot.lane.b32.xlu0 %v2521, 64
  %v2542 = vpop.permute.xlu0 %2541
  %2543 = vrot.lane.b32.xlu0 %v2522, 64
  %v2544 = vpop.permute.xlu0 %2543
  %2545 = vrot.lane.b32.xlu0 %v2523, 64
  %v2546 = vpop.permute.xlu0 %2545
  %2547 = vrot.lane.b32.xlu0 %v2524, 64
  %v2548 = vpop.permute.xlu0 %2547
  %v2557 = vadd.f32 %v2477, %v2534
  %v2558 = vadd.f32 %v2478, %v2536
  %v2559 = vadd.f32 %v2479, %v2538
  %v2560 = vadd.f32 %v2480, %v2540
  %v2561 = vadd.f32 %v2481, %v2542
  %v2562 = vadd.f32 %v2482, %v2544
  %v2563 = vadd.f32 %v2483, %v2546
  %v2564 = vadd.f32 %v2484, %v2548
  %2565 = vset.pattern.permute.xlu0 3
  %2566 = vperm.xlu0 %2565, %v2349
  %v2567 = vpop.permute.xlu0 %2566
  %2569 = vset.pattern.permute.xlu0 3
  %2570 = vperm.xlu0 %2569, %v2350
  %v2571 = vpop.permute.xlu0 %2570
  %2573 = vset.pattern.permute.xlu0 3
  %2574 = vperm.xlu0 %2573, %v2351
  %v2575 = vpop.permute.xlu0 %2574
  %2577 = vset.pattern.permute.xlu0 3
  %2578 = vperm.xlu0 %2577, %v2352
  %v2579 = vpop.permute.xlu0 %2578
  %2581 = vset.pattern.permute.xlu0 3
  %2582 = vperm.xlu0 %2581, %v2353
  %v2583 = vpop.permute.xlu0 %2582
  %2585 = vset.pattern.permute.xlu0 3
  %2586 = vperm.xlu0 %2585, %v2354
  %v2587 = vpop.permute.xlu0 %2586
  %2589 = vset.pattern.permute.xlu0 3
  %2590 = vperm.xlu0 %2589, %v2355
  %v2591 = vpop.permute.xlu0 %2590
  %2593 = vset.pattern.permute.xlu0 3
  %2594 = vperm.xlu0 %2593, %v2356
  %v2595 = vpop.permute.xlu0 %2594
  %v2597 = vmul.f32 %v2567, %v2000
  %v2598 = vmul.f32 %v2571, %v2002
  %v2599 = vmul.f32 %v2575, %v2004
  %v2600 = vmul.f32 %v2579, %v2006
  %v2601 = vmul.f32 %v2583, %v2008
  %v2602 = vmul.f32 %v2587, %v2010
  %v2603 = vmul.f32 %v2591, %v2012
  %v2604 = vmul.f32 %v2595, %v2014
  %2613 = vrot.lane.b32.xlu0 %v2597, 32
  %v2614 = vpop.permute.xlu0 %2613
  %2615 = vrot.lane.b32.xlu0 %v2598, 32
  %v2616 = vpop.permute.xlu0 %2615
  %2617 = vrot.lane.b32.xlu0 %v2599, 32
  %v2618 = vpop.permute.xlu0 %2617
  %2619 = vrot.lane.b32.xlu0 %v2600, 32
  %v2620 = vpop.permute.xlu0 %2619
  %2621 = vrot.lane.b32.xlu0 %v2601, 32
  %v2622 = vpop.permute.xlu0 %2621
  %2623 = vrot.lane.b32.xlu0 %v2602, 32
  %v2624 = vpop.permute.xlu0 %2623
  %2625 = vrot.lane.b32.xlu0 %v2603, 32
  %v2626 = vpop.permute.xlu0 %2625
  %2627 = vrot.lane.b32.xlu0 %v2604, 32
  %v2628 = vpop.permute.xlu0 %2627
  %v2637 = vadd.f32 %v2557, %v2614
  %v2638 = vadd.f32 %v2558, %v2616
  %v2639 = vadd.f32 %v2559, %v2618
  %v2640 = vadd.f32 %v2560, %v2620
  %v2641 = vadd.f32 %v2561, %v2622
  %v2642 = vadd.f32 %v2562, %v2624
  %v2643 = vadd.f32 %v2563, %v2626
  %v2644 = vadd.f32 %v2564, %v2628
  %2645 = vset.pattern.permute.xlu0 4
  %2646 = vperm.xlu0 %2645, %v2349
  %v2647 = vpop.permute.xlu0 %2646
  %2649 = vset.pattern.permute.xlu0 4
  %2650 = vperm.xlu0 %2649, %v2350
  %v2651 = vpop.permute.xlu0 %2650
  %2653 = vset.pattern.permute.xlu0 4
  %2654 = vperm.xlu0 %2653, %v2351
  %v2655 = vpop.permute.xlu0 %2654
  %2657 = vset.pattern.permute.xlu0 4
  %2658 = vperm.xlu0 %2657, %v2352
  %v2659 = vpop.permute.xlu0 %2658
  %2661 = vset.pattern.permute.xlu0 4
  %2662 = vperm.xlu0 %2661, %v2353
  %v2663 = vpop.permute.xlu0 %2662
  %2665 = vset.pattern.permute.xlu0 4
  %2666 = vperm.xlu0 %2665, %v2354
  %v2667 = vpop.permute.xlu0 %2666
  %2669 = vset.pattern.permute.xlu0 4
  %2670 = vperm.xlu0 %2669, %v2355
  %v2671 = vpop.permute.xlu0 %2670
  %2673 = vset.pattern.permute.xlu0 4
  %2674 = vperm.xlu0 %2673, %v2356
  %v2675 = vpop.permute.xlu0 %2674
  %v2677 = vmul.f32 %v2647, %v2001
  %v2678 = vmul.f32 %v2651, %v2003
  %v2679 = vmul.f32 %v2655, %v2005
  %v2680 = vmul.f32 %v2659, %v2007
  %v2681 = vmul.f32 %v2663, %v2009
  %v2682 = vmul.f32 %v2667, %v2011
  %v2683 = vmul.f32 %v2671, %v2013
  %v2684 = vmul.f32 %v2675, %v2015
  %v2685 = vadd.f32 %v2637, %v2677
  %v2686 = vadd.f32 %v2638, %v2678
  %v2687 = vadd.f32 %v2639, %v2679
  %v2688 = vadd.f32 %v2640, %v2680
  %v2689 = vadd.f32 %v2641, %v2681
  %v2690 = vadd.f32 %v2642, %v2682
  %v2691 = vadd.f32 %v2643, %v2683
  %v2692 = vadd.f32 %v2644, %v2684
  %v2694 = vsel %vm317, %v2685, 0
  %v2697 = vsel %vm317, %v2686, 0
  %v2700 = vsel %vm317, %v2687, 0
  %v2703 = vsel %vm317, %v2688, 0
  %v2706 = vsel %vm317, %v2689, 0
  %v2709 = vsel %vm317, %v2690, 0
  %v2712 = vsel %vm317, %v2691, 0
  %v2715 = vsel %vm317, %v2692, 0
  %2717 = vmatprep.subr.mxu0 0.0
  %2718 = vmatpush1.msra.mxu0 %v56
  %2719 = vmatprep.subr.mxu0 0.0
  %2720 = vmatpush1.msra.mxu0 %v57
  %2721 = vmatprep.subr.mxu0 0.0
  %2722 = vmatpush1.msra.mxu0 %v58
  %2723 = vmatprep.subr.mxu0 0.0
  %2724 = vmatpush1.msra.mxu0 %v59
  %2725 = vmatprep.subr.mxu0 0.0
  %2726 = vmatpush1.msra.mxu0 0.0
  %2727 = vmatprep.subr.mxu0 0.0
  %2728 = vmatpush1.msra.mxu0 0.0
  %2729 = vmatprep.subr.mxu0 0.0
  %2730 = vmatpush1.msra.mxu0 0.0
  %2731 = vmatprep.subr.mxu0 0.0
  %2732 = vmatpush1.msra.mxu0 0.0
  %2733 = vmatprep.subr.mxu0 0.0
  %2734 = vmatpush1.msra.mxu0 0.0
  %2735 = vmatprep.subr.mxu0 0.0
  %2736 = vmatpush1.msra.mxu0 0.0
  %2737 = vmatprep.subr.mxu0 0.0
  %2738 = vmatpush1.msra.mxu0 0.0
  %2739 = vmatprep.subr.mxu0 0.0
  %2740 = vmatpush1.msra.mxu0 0.0
  %2741 = vmatprep.subr.mxu0 0.0
  %2742 = vmatpush1.msra.mxu0 0.0
  %2743 = vmatprep.subr.mxu0 0.0
  %2744 = vmatpush1.msra.mxu0 0.0
  %2745 = vmatprep.subr.mxu0 0.0
  %2746 = vmatpush1.msra.mxu0 0.0
  %2747 = vmatprep.subr.mxu0 0.0
  %2748 = vmatpush1.msra.mxu0 0.0
  %2749 = vmatprep.subr.mxu0 0.0
  %2750 = vmatpush1.msra.mxu0 0.0
  %2751 = vmatprep.subr.mxu0 0.0
  %2752 = vmatpush1.msra.mxu0 0.0
  %2753 = vmatprep.subr.mxu0 0.0
  %2754 = vmatpush1.msra.mxu0 0.0
  %2755 = vmatprep.subr.mxu0 0.0
  %2756 = vmatpush1.msra.mxu0 0.0
  %2757 = vmatprep.subr.mxu0 0.0
  %2758 = vmatpush1.msra.mxu0 0.0
  %2759 = vmatprep.subr.mxu0 0.0
  %2760 = vmatpush1.msra.mxu0 0.0
  %2761 = vmatprep.subr.mxu0 0.0
  %2762 = vmatpush1.msra.mxu0 0.0
  %2763 = vmatprep.subr.mxu0 0.0
  %2764 = vmatpush1.msra.mxu0 0.0
  %2765 = vmatprep.subr.mxu0 0.0
  %2766 = vmatpush1.msra.mxu0 0.0
  %2767 = vmatprep.subr.mxu0 0.0
  %2768 = vmatpush1.msra.mxu0 0.0
  %2769 = vmatprep.subr.mxu0 0.0
  %2770 = vmatpush1.msra.mxu0 0.0
  %2771 = vmatprep.subr.mxu0 0.0
  %2772 = vmatpush1.msra.mxu0 0.0
  %2773 = vmatprep.subr.mxu0 0.0
  %2774 = vmatpush1.msra.mxu0 0.0
  %2775 = vmatprep.subr.mxu0 0.0
  %2776 = vmatpush1.msra.mxu0 0.0
  %2777 = vmatprep.subr.mxu0 0.0
  %2778 = vmatpush1.msra.mxu0 0.0
  %2779 = vmatprep.subr.mxu0 0.0
  %2780 = vmatpush1.msra.mxu0 0.0
  %2781 = vmatprep.mubr.f32.mxu0 0.0
  %2782 = vmatmul.mubr.f32.gmra.mrb[0].mxu0 %v2694
  %v2783 = vpop.f32.mrb[0].mxu0
  %v2784 = vadd.f32 0.0, %v2783
  %v2785 = vpop.f32.mrb[0].mxu0
  %2786 = vmatprep.mubr.f32.mxu0 0.0
  %2787 = vmatmul.mubr.f32.gmra.mrb[0].mxu0 %v2697
  %v2788 = vpop.f32.mrb[0].mxu0
  %v2789 = vadd.f32 0.0, %v2788
  %v2790 = vpop.f32.mrb[0].mxu0
  %2791 = vmatprep.mubr.f32.mxu0 0.0
  %2792 = vmatmul.mubr.f32.gmra.mrb[0].mxu0 %v2700
  %v2793 = vpop.f32.mrb[0].mxu0
  %v2794 = vadd.f32 0.0, %v2793
  %v2795 = vpop.f32.mrb[0].mxu0
  %2796 = vmatprep.mubr.f32.mxu0 0.0
  %2797 = vmatmul.mubr.f32.gmra.mrb[0].mxu0 %v2703
  %v2798 = vpop.f32.mrb[0].mxu0
  %v2799 = vadd.f32 0.0, %v2798
  %v2800 = vpop.f32.mrb[0].mxu0
  %2801 = vmatprep.mubr.f32.mxu0 0.0
  %2802 = vmatmul.mubr.f32.gmra.mrb[0].mxu0 %v2706
  %v2803 = vpop.f32.mrb[0].mxu0
  %v2804 = vadd.f32 0.0, %v2803
  %v2805 = vpop.f32.mrb[0].mxu0
  %2806 = vmatprep.mubr.f32.mxu0 0.0
  %2807 = vmatmul.mubr.f32.gmra.mrb[0].mxu0 %v2709
  %v2808 = vpop.f32.mrb[0].mxu0
  %v2809 = vadd.f32 0.0, %v2808
  %v2810 = vpop.f32.mrb[0].mxu0
  %2811 = vmatprep.mubr.f32.mxu0 0.0
  %2812 = vmatmul.mubr.f32.gmra.mrb[0].mxu0 %v2712
  %v2813 = vpop.f32.mrb[0].mxu0
  %v2814 = vadd.f32 0.0, %v2813
  %v2815 = vpop.f32.mrb[0].mxu0
  %2816 = vmatprep.mubr.f32.mxu0 0.0
  %2817 = vmatmul.mubr.f32.gmra.mrb[0].mxu0 %v2715
  %v2818 = vpop.f32.mrb[0].mxu0
  %v2819 = vadd.f32 0.0, %v2818
  %v2820 = vpop.f32.mrb[0].mxu0
  %2821 = vdwg.mxu0
  %v2823 = vlaneseq
  %v2824 = vshrl.u32 %v2823, 7
  %v2825 = vsub.s32 0, %v2824
  %v2826 = vrot.slane %v60, %v2825
  %2828 = vmatprep.subr.mxu0 0.0
  %2829 = vmatpush1.msra.mxu0 %v2784
  %2830 = vmatprep.subr.mxu0 0.0
  %2831 = vmatpush1.msra.mxu0 %v2789
  %2832 = vmatprep.subr.mxu0 0.0
  %2833 = vmatpush1.msra.mxu0 %v2794
  %2834 = vmatprep.subr.mxu0 0.0
  %2835 = vmatpush1.msra.mxu0 %v2799
  %2836 = vmatprep.subr.mxu0 0.0
  %2837 = vmatpush1.msra.mxu0 %v2804
  %2838 = vmatprep.subr.mxu0 0.0
  %2839 = vmatpush1.msra.mxu0 %v2809
  %2840 = vmatprep.subr.mxu0 0.0
  %2841 = vmatpush1.msra.mxu0 %v2814
  %2842 = vmatprep.subr.mxu0 0.0
  %2843 = vmatpush1.msra.mxu0 %v2819
  %2844 = vmatprep.subr.mxu0 0.0
  %2845 = vmatpush1.msra.mxu0 0.0
  %2846 = vmatprep.subr.mxu0 0.0
  %2847 = vmatpush1.msra.mxu0 0.0
  %2848 = vmatprep.subr.mxu0 0.0
  %2849 = vmatpush1.msra.mxu0 0.0
  %2850 = vmatprep.subr.mxu0 0.0
  %2851 = vmatpush1.msra.mxu0 0.0
  %2852 = vmatprep.subr.mxu0 0.0
  %2853 = vmatpush1.msra.mxu0 0.0
  %2854 = vmatprep.subr.mxu0 0.0
  %2855 = vmatpush1.msra.mxu0 0.0
  %2856 = vmatprep.subr.mxu0 0.0
  %2857 = vmatpush1.msra.mxu0 0.0
  %2858 = vmatprep.subr.mxu0 0.0
  %2859 = vmatpush1.msra.mxu0 0.0
  %2860 = vmatprep.subr.mxu0 0.0
  %2861 = vmatpush1.msra.mxu0 0.0
  %2862 = vmatprep.subr.mxu0 0.0
  %2863 = vmatpush1.msra.mxu0 0.0
  %2864 = vmatprep.subr.mxu0 0.0
  %2865 = vmatpush1.msra.mxu0 0.0
  %2866 = vmatprep.subr.mxu0 0.0
  %2867 = vmatpush1.msra.mxu0 0.0
  %2868 = vmatprep.subr.mxu0 0.0
  %2869 = vmatpush1.msra.mxu0 0.0
  %2870 = vmatprep.subr.mxu0 0.0
  %2871 = vmatpush1.msra.mxu0 0.0
  %2872 = vmatprep.subr.mxu0 0.0
  %2873 = vmatpush1.msra.mxu0 0.0
  %2874 = vmatprep.subr.mxu0 0.0
  %2875 = vmatpush1.msra.mxu0 0.0
  %2876 = vmatprep.subr.mxu0 0.0
  %2877 = vmatpush1.msra.mxu0 0.0
  %2878 = vmatprep.subr.mxu0 0.0
  %2879 = vmatpush1.msra.mxu0 0.0
  %2880 = vmatprep.subr.mxu0 0.0
  %2881 = vmatpush1.msra.mxu0 0.0
  %2882 = vmatprep.subr.mxu0 0.0
  %2883 = vmatpush1.msra.mxu0 0.0
  %2884 = vmatprep.subr.mxu0 0.0
  %2885 = vmatpush1.msra.mxu0 0.0
  %2886 = vmatprep.subr.mxu0 0.0
  %2887 = vmatpush1.msra.mxu0 0.0
  %2888 = vmatprep.subr.mxu0 0.0
  %2889 = vmatpush1.msra.mxu0 0.0
  %2890 = vmatprep.subr.mxu0 0.0
  %2891 = vmatpush1.msra.mxu0 0.0
  %2892 = vmatprep.mubr.f32.mxu0 0.0
  %2893 = vmatmul.mubr.f32.gmra.mrb[0].mxu0 %v799
  %v2894 = vpop.f32.mrb[0].mxu0
  %v2895 = vadd.f32 %v2826, %v2894
  %v2896 = vpop.f32.mrb[0].mxu0
  %2897 = vmatprep.mubr.f32.mxu0 0.0
  %2898 = vmatmul.mubr.f32.gmra.mrb[0].mxu0 %v802
  %v2899 = vpop.f32.mrb[0].mxu0
  %v2900 = vadd.f32 %v2826, %v2899
  %v2901 = vpop.f32.mrb[0].mxu0
  %2902 = vmatprep.mubr.f32.mxu0 0.0
  %2903 = vmatmul.mubr.f32.gmra.mrb[0].mxu0 %v805
  %v2904 = vpop.f32.mrb[0].mxu0
  %v2905 = vadd.f32 %v2826, %v2904
  %v2906 = vpop.f32.mrb[0].mxu0
  %2907 = vmatprep.mubr.f32.mxu0 0.0
  %2908 = vmatmul.mubr.f32.gmra.mrb[0].mxu0 %v808
  %v2909 = vpop.f32.mrb[0].mxu0
  %v2910 = vadd.f32 %v2826, %v2909
  %v2911 = vpop.f32.mrb[0].mxu0
  %2912 = vmatprep.mubr.f32.mxu0 0.0
  %2913 = vmatmul.mubr.f32.gmra.mrb[0].mxu0 %v811
  %v2914 = vpop.f32.mrb[0].mxu0
  %v2915 = vadd.f32 %v2826, %v2914
  %v2916 = vpop.f32.mrb[0].mxu0
  %2917 = vmatprep.mubr.f32.mxu0 0.0
  %2918 = vmatmul.mubr.f32.gmra.mrb[0].mxu0 %v814
  %v2919 = vpop.f32.mrb[0].mxu0
  %v2920 = vadd.f32 %v2826, %v2919
  %v2921 = vpop.f32.mrb[0].mxu0
  %2922 = vmatprep.mubr.f32.mxu0 0.0
  %2923 = vmatmul.mubr.f32.gmra.mrb[0].mxu0 %v817
  %v2924 = vpop.f32.mrb[0].mxu0
  %v2925 = vadd.f32 %v2826, %v2924
  %v2926 = vpop.f32.mrb[0].mxu0
  %2927 = vmatprep.mubr.f32.mxu0 0.0
  %2928 = vmatmul.mubr.f32.gmra.mrb[0].mxu0 %v820
  %v2929 = vpop.f32.mrb[0].mxu0
  %v2930 = vadd.f32 %v2826, %v2929
  %v2931 = vpop.f32.mrb[0].mxu0
  %2932 = vdwg.mxu0
  %vm2933 = vcmask 64512
  %v2934 = vsel %vm2933, %v2895, -inf
  %2935 = vmax.xlane.f32.xlu0 %v2934
  %v2936 = vpop.xlane.xlu0 %2935
  %v2937 = vsel %vm2933, %v2900, -inf
  %2938 = vmax.xlane.f32.xlu0 %v2937
  %v2939 = vpop.xlane.xlu0 %2938
  %v2940 = vsel %vm2933, %v2905, -inf
  %2941 = vmax.xlane.f32.xlu0 %v2940
  %v2942 = vpop.xlane.xlu0 %2941
  %v2943 = vsel %vm2933, %v2910, -inf
  %2944 = vmax.xlane.f32.xlu0 %v2943
  %v2945 = vpop.xlane.xlu0 %2944
  %v2946 = vsel %vm2933, %v2915, -inf
  %2947 = vmax.xlane.f32.xlu0 %v2946
  %v2948 = vpop.xlane.xlu0 %2947
  %v2949 = vsel %vm2933, %v2920, -inf
  %2950 = vmax.xlane.f32.xlu0 %v2949
  %v2951 = vpop.xlane.xlu0 %2950
  %v2952 = vsel %vm2933, %v2925, -inf
  %2953 = vmax.xlane.f32.xlu0 %v2952
  %v2954 = vpop.xlane.xlu0 %2953
  %v2955 = vsel %vm2933, %v2930, -inf
  %2956 = vmax.xlane.f32.xlu0 %v2955
  %v2957 = vpop.xlane.xlu0 %2956
  %v2958 = vsub.f32 %v2895, %v2936
  %v2959 = vsub.f32 %v2900, %v2939
  %v2960 = vsub.f32 %v2905, %v2942
  %v2961 = vsub.f32 %v2910, %v2945
  %v2962 = vsub.f32 %v2915, %v2948
  %v2963 = vsub.f32 %v2920, %v2951
  %v2964 = vsub.f32 %v2925, %v2954
  %v2965 = vsub.f32 %v2930, %v2957
  %v2966 = vmul.f32 %v2958, 1.442695
  %v2967 = vpow.pop %v2966
  %v2968 = vmul.f32 %v2959, 1.442695
  %v2969 = vpow.pop %v2968
  %v2970 = vmul.f32 %v2960, 1.442695
  %v2971 = vpow.pop %v2970
  %v2972 = vmul.f32 %v2961, 1.442695
  %v2973 = vpow.pop %v2972
  %v2974 = vmul.f32 %v2962, 1.442695
  %v2975 = vpow.pop %v2974
  %v2976 = vmul.f32 %v2963, 1.442695
  %v2977 = vpow.pop %v2976
  %v2978 = vmul.f32 %v2964, 1.442695
  %v2979 = vpow.pop %v2978
  %v2980 = vmul.f32 %v2965, 1.442695
  %v2981 = vpow.pop %v2980
  %v2982 = vsel %vm2933, %v2967, 0.0
  %2983 = vadd.xlane.f32.xlu0 %v2982
  %v2984 = vpop.xlane.xlu0 %2983
  %v2985 = vsel %vm2933, %v2969, 0.0
  %2986 = vadd.xlane.f32.xlu0 %v2985
  %v2987 = vpop.xlane.xlu0 %2986
  %v2988 = vsel %vm2933, %v2971, 0.0
  %2989 = vadd.xlane.f32.xlu0 %v2988
  %v2990 = vpop.xlane.xlu0 %2989
  %v2991 = vsel %vm2933, %v2973, 0.0
  %2992 = vadd.xlane.f32.xlu0 %v2991
  %v2993 = vpop.xlane.xlu0 %2992
  %v2994 = vsel %vm2933, %v2975, 0.0
  %2995 = vadd.xlane.f32.xlu0 %v2994
  %v2996 = vpop.xlane.xlu0 %2995
  %v2997 = vsel %vm2933, %v2977, 0.0
  %2998 = vadd.xlane.f32.xlu0 %v2997
  %v2999 = vpop.xlane.xlu0 %2998
  %v3000 = vsel %vm2933, %v2979, 0.0
  %3001 = vadd.xlane.f32.xlu0 %v3000
  %v3002 = vpop.xlane.xlu0 %3001
  %v3003 = vsel %vm2933, %v2981, 0.0
  %3004 = vadd.xlane.f32.xlu0 %v3003
  %v3005 = vpop.xlane.xlu0 %3004
  %v3006 = vlog2.pop %v2984
  %v3007 = vmul.f32 %v3006, 0.6931472
  %v3008 = vlog2.pop %v2987
  %v3009 = vmul.f32 %v3008, 0.6931472
  %v3010 = vlog2.pop %v2990
  %v3011 = vmul.f32 %v3010, 0.6931472
  %v3012 = vlog2.pop %v2993
  %v3013 = vmul.f32 %v3012, 0.6931472
  %v3014 = vlog2.pop %v2996
  %v3015 = vmul.f32 %v3014, 0.6931472
  %v3016 = vlog2.pop %v2999
  %v3017 = vmul.f32 %v3016, 0.6931472
  %v3018 = vlog2.pop %v3002
  %v3019 = vmul.f32 %v3018, 0.6931472
  %v3020 = vlog2.pop %v3005
  %v3021 = vmul.f32 %v3020, 0.6931472
  %v3022 = vsub.f32 %v2958, %v3007
  %v3023 = vsub.f32 %v2959, %v3009
  %v3024 = vsub.f32 %v2960, %v3011
  %v3025 = vsub.f32 %v2961, %v3013
  %v3026 = vsub.f32 %v2962, %v3015
  %v3027 = vsub.f32 %v2963, %v3017
  %v3028 = vsub.f32 %v2964, %v3019
  %v3029 = vsub.f32 %v2965, %v3021
  %3030 = vst.msk [vmem:[%s9] sm:$0xff] %vm2933, %v3022
  %3031 = vst.msk [vmem:[%s9 + $0x8] sm:$0xff] %vm2933, %v3023
  %3032 = vst.msk [vmem:[%s9 + $0x10] sm:$0xff] %vm2933, %v3024
  %3033 = vst.msk [vmem:[%s9 + $0x18] sm:$0xff] %vm2933, %v3025
  %3034 = vst.msk [vmem:[%s9 + $0x20] sm:$0xff] %vm2933, %v3026
  %3035 = vst.msk [vmem:[%s9 + $0x28] sm:$0xff] %vm2933, %v3027
  %3036 = vst.msk [vmem:[%s9 + $0x30] sm:$0xff] %vm2933, %v3028
  %3037 = vst.msk [vmem:[%s9 + $0x38] sm:$0xff] %vm2933, %v3029
  // Predicated region
  $region38: #{gcnmf_forward.1} parent=0 // pred_check
    _
  $region39: #{gcnmf_forward.1} parent=0 // pred_check_branch
    %3039 = sbr.rel (0) target = $region41
  $region40: #{gcnmf_forward.1} parent=0 // pred_region
    _
  $region41: #{gcnmf_forward.1} parent=0 // pred_fallthru
    _
  // Predicated region
  $region42: #{gcnmf_forward.1} parent=0 // pred_check
    _
  $region43: #{gcnmf_forward.1} parent=0 // pred_check_branch
    %3041 = sbr.rel (0) target = $region45
  $region44: #{gcnmf_forward.1} parent=0 // pred_region
    _
  $region45: #{gcnmf_forward.1} parent=0 // pred_fallthru
    _

</llo_original>
